<compile_context>
chip_gen: v7x
topology: tpu7x:2x2x1
jax: 0.10.0
libtpu: 0.0.40
codegen_flags: <defaults>
</compile_context>

<pallas_src>
import functools
from math import sqrt

import jax
import jax.numpy as jnp
from jax.experimental import pallas as pl
from jax.experimental.pallas import tpu as pltpu


def _layer_norm(z, gamma, beta, eps=1e-5):
    mu = jnp.mean(z, axis=-1, keepdims=True)
    var = jnp.mean((z - mu) ** 2, axis=-1, keepdims=True)
    return (z - mu) * jax.lax.rsqrt(var + eps) * gamma + beta


def encoder_kernel(x_ref, wqkv_ref, c3_ref,
                   ln1_g_ref, ln1_b_ref,
                   w1_ref, b1_ref, w2_ref, b2_ref,
                   ln2_g_ref, ln2_b_ref,
                   out_ref, *, n_heads, d_k):
    BB, S, D = x_ref.shape
    HD = n_heads * d_k

    xb = x_ref[...]                       # (BB, S, D) bf16
    x2 = xb.reshape(BB * S, D)            # pack rows for the large matmuls
    x_f32 = x2.astype(jnp.float32)

    # ---- fused Q/K/V projection: one bf16 MXU matmul (all heads, all of Q/K/V) ----
    qkv = jnp.dot(x2, wqkv_ref[...],
                  preferred_element_type=jnp.float32)        # (BB*S, 3*HD) f32

    inv_sqrt_dk = 1.0 / sqrt(d_k)

    # ---- attention: static unrolled loop over (batch-in-block, head) ----------
    # No concatenate of head outputs: accumulate head_h @ C_h directly.
    # (At realistic d_model the per-head column slices below are >=128-lane wide.)
    pooled_rows = []
    for b in range(BB):
        r0 = b * S
        acc = jnp.zeros((S, D), jnp.float32)
        for h in range(n_heads):
            q = (qkv[r0:r0 + S, h * d_k:(h + 1) * d_k]
                 * inv_sqrt_dk).astype(jnp.bfloat16)
            k = qkv[r0:r0 + S, HD + h * d_k: HD + (h + 1) * d_k].astype(jnp.bfloat16)
            v = qkv[r0:r0 + S, 2 * HD + h * d_k: 2 * HD + (h + 1) * d_k].astype(jnp.bfloat16)

            s = jnp.dot(q, k.T, preferred_element_type=jnp.float32)     # (S, S) f32
            s = s - jnp.max(s, axis=-1, keepdims=True)
            e = jnp.exp(s)
            p = e * pl.reciprocal(jnp.sum(e, axis=-1, keepdims=True), approx=True)

            head_out = jnp.dot(p.astype(jnp.bfloat16), v,
                               preferred_element_type=jnp.float32)      # (S, d_k)
            acc = acc + jnp.dot(head_out.astype(jnp.bfloat16), c3_ref[h],
                                preferred_element_type=jnp.float32)     # (S, D)
        pooled_rows.append(acc)
    pooled = pooled_rows[0] if BB == 1 else jnp.concatenate(pooled_rows, axis=0)

    # ---- residual + LayerNorm 1 (f32) ------------------------------------------
    ln1 = _layer_norm(pooled + x_f32, ln1_g_ref[...], ln1_b_ref[...])

    # ---- feed-forward (bf16 matmuls, f32 accumulate / bias / relu) --------------
    h1 = jnp.dot(ln1.astype(jnp.bfloat16), w1_ref[...],
                 preferred_element_type=jnp.float32) + b1_ref[...]
    h1 = jnp.maximum(h1, 0.0)
    ff = jnp.dot(h1.astype(jnp.bfloat16), w2_ref[...],
                 preferred_element_type=jnp.float32) + b2_ref[...]

    # ---- residual + LayerNorm 2 (f32) ------------------------------------------
    ln2 = _layer_norm(ff + ln1, ln2_g_ref[...], ln2_b_ref[...])
    out_ref[...] = ln2.reshape(BB, S, D).astype(out_ref.dtype)


def transformer_encoder(x, params, *, n_heads, d_k, batch_block=None):
    B, S, D = x.shape
    HD = n_heads * d_k
    d_ff = params["w1"].shape[1]

    # Pack several batch elements per grid step (amortizes per-step overhead,
    # fills sublanes). Pick the largest divisor of B up to 8.
    if batch_block is None:
        batch_block = 1
        for cand in range(min(B, 8), 0, -1):
            if B % cand == 0:
                batch_block = cand
                break
    assert B % batch_block == 0, "batch_block must divide B"
    BB = batch_block

    # bf16 matmul operands at the pallas_call boundary (f32 accumulation inside).
    # Fused QKV weight; C reshaped to (H, d_k, D) so each head's block is
    # indexed along the leading dim (no lane slicing of C inside the kernel).
    xb = x.astype(jnp.bfloat16)
    wqkv = jnp.concatenate(
        [params["wq"], params["wk"], params["wv"]], axis=1).astype(jnp.bfloat16)
    c3 = params["c"].reshape(n_heads, d_k, D).astype(jnp.bfloat16)
    w1 = params["w1"].astype(jnp.bfloat16)
    w2 = params["w2"].astype(jnp.bfloat16)

    def const_spec(shape):                       # weights: block index never changes
        return pl.BlockSpec(shape, lambda b: (0,) * len(shape))

    in_specs = [
        pl.BlockSpec((BB, S, D), lambda b: (b, 0, 0)),   # x
        const_spec((D, 3 * HD)),                          # fused W_QKV (bf16)
        const_spec((n_heads, d_k, D)),                    # C, per-head blocks (bf16)
        const_spec((1, D)), const_spec((1, D)),           # LN1 gamma/beta (f32)
        const_spec((D, d_ff)), const_spec((1, d_ff)),     # FFN layer1 W (bf16) / b (f32)
        const_spec((d_ff, D)), const_spec((1, D)),        # FFN layer2 W (bf16) / b (f32)
        const_spec((1, D)), const_spec((1, D)),           # LN2 gamma/beta (f32)
    ]

    flops = B * (2 * S * D * (3 * HD)               # QKV projection
                 + n_heads * (2 * S * S * d_k) * 2  # scores + PV
                 + 2 * S * HD * D                   # head pooling with C
                 + 2 * S * D * d_ff + 2 * S * d_ff * D)
    transcendentals = B * (n_heads * S * S + n_heads * S + 4 * S)
    bytes_accessed = (xb.size * 2 + B * S * D * 4
                      + wqkv.size * 2 + c3.size * 2 + w1.size * 2 + w2.size * 2
                      + (4 * D + 2 * d_ff) * 4)

    kernel = functools.partial(encoder_kernel, n_heads=n_heads, d_k=d_k)
    return pl.pallas_call(
        kernel,
        out_shape=jax.ShapeDtypeStruct((B, S, D), jnp.float32),
        grid_spec=pltpu.PrefetchScalarGridSpec(
            num_scalar_prefetch=0,
            grid=(B // BB,),
            in_specs=in_specs,
            out_specs=pl.BlockSpec((BB, S, D), lambda b: (b, 0, 0)),
        ),
        compiler_params=pltpu.CompilerParams(
            dimension_semantics=("parallel",),
            vmem_limit_bytes=32 * 1024 * 1024),
        cost_estimate=pl.CostEstimate(
            flops=flops,
            transcendentals=transcendentals,
            bytes_accessed=bytes_accessed),
    )(xb, wqkv, c3,
      params["ln1_g"], params["ln1_b"],
      w1, params["b1"], w2, params["b2"],
      params["ln2_g"], params["ln2_b"])


def reference(x, p, *, n_heads, d_k):
    """Pure-f32 JAX reference mirroring the PyTorch module."""
    Q = x @ p["wq"]
    K = x @ p["wk"]
    V = x @ p["wv"]
    outs = []
    for h in range(n_heads):
        q = Q[..., h * d_k:(h + 1) * d_k]
        k = K[..., h * d_k:(h + 1) * d_k]
        v = V[..., h * d_k:(h + 1) * d_k]
        aw = jnp.einsum("bsd,btd->bst", q, k) / sqrt(d_k)
        am = jax.nn.softmax(aw, axis=-1)
        outs.append(am @ v)
    pooled = jnp.concatenate(outs, axis=-1) @ p["c"]

    def ln(z, g, b, eps=1e-5):
        mu = z.mean(-1, keepdims=True)
        var = ((z - mu) ** 2).mean(-1, keepdims=True)
        return (z - mu) / jnp.sqrt(var + eps) * g + b

    l1 = ln(pooled + x, p["ln1_g"][0], p["ln1_b"][0])
    ff = jnp.maximum(l1 @ p["w1"] + p["b1"][0], 0.0) @ p["w2"] + p["b2"][0]
    return ln(ff + l1, p["ln2_g"][0], p["ln2_b"][0])


def init_params(key, d_model, n_heads, d_ff):
    d_k = d_model // n_heads
    HD = n_heads * d_k
    ks = jax.random.split(key, 8)
    u = lambda k, shape, lo, hi: jax.random.uniform(k, shape, jnp.float32, lo, hi)
    lin_bound1 = 1.0 / sqrt(d_model)
    lin_bound2 = 1.0 / sqrt(d_ff)
    return {
        # Attention projections (torch.rand - 0.5  ->  U(-0.5, 0.5))
        "wq": u(ks[0], (d_model, HD), -0.5, 0.5),
        "wk": u(ks[1], (d_model, HD), -0.5, 0.5),
        "wv": u(ks[2], (d_model, HD), -0.5, 0.5),
        "c":  u(ks[3], (HD, d_model), -0.5, 0.5),
        # LayerNorm 1 (default torch init)
        "ln1_g": jnp.ones((1, d_model), jnp.float32),
        "ln1_b": jnp.zeros((1, d_model), jnp.float32),
        # FFN (linear weights stored as (in, out); biases kept 2D for TPU layout)
        "w1": u(ks[4], (d_model, d_ff), -lin_bound1, lin_bound1),
        "b1": u(ks[5], (1, d_ff), -lin_bound1, lin_bound1),
        "w2": u(ks[6], (d_ff, d_model), -lin_bound2, lin_bound2),
        "b2": u(ks[7], (1, d_model), -lin_bound2, lin_bound2),
        # LayerNorm 2
        "ln2_g": jnp.ones((1, d_model), jnp.float32),
        "ln2_b": jnp.zeros((1, d_model), jnp.float32),
    }


if __name__ == "__main__":
    B, S, D = 2, 8, 32
    n_heads, d_ff = 4, 64
    d_k = D // n_heads

    key = jax.random.PRNGKey(0)
    k_x, k_p = jax.random.split(key)
    x = jax.random.normal(k_x, (B, S, D), jnp.float32)
    params = init_params(k_p, D, n_heads, d_ff)

    out = transformer_encoder(x, params, n_heads=n_heads, d_k=d_k)
    out = jax.block_until_ready(out)

    ref = reference(x, params, n_heads=n_heads, d_k=d_k)
    assert out.shape == (B, S, D)
    # bf16 matmul operands + approx reciprocal => looser tolerance than pure f32.
    assert jnp.allclose(out, ref, rtol=5e-2, atol=5e-2), (
        f"max abs err {jnp.max(jnp.abs(out - ref))}")
    print("KERNEL_OK")
</pallas_src>

<mosaic_0001>
module attributes {stable_mosaic.version = 11 : i64} {
  func.func @encoder_kernel(%arg0: i32, %arg1: memref<2x8x32xbf16, #tpu.memory_space<vmem>>, %arg2: memref<32x96xbf16, #tpu.memory_space<vmem>>, %arg3: memref<4x8x32xbf16, #tpu.memory_space<vmem>>, %arg4: memref<1x32xf32, #tpu.memory_space<vmem>>, %arg5: memref<1x32xf32, #tpu.memory_space<vmem>>, %arg6: memref<32x64xbf16, #tpu.memory_space<vmem>>, %arg7: memref<1x64xf32, #tpu.memory_space<vmem>>, %arg8: memref<64x32xbf16, #tpu.memory_space<vmem>>, %arg9: memref<1x32xf32, #tpu.memory_space<vmem>>, %arg10: memref<1x32xf32, #tpu.memory_space<vmem>>, %arg11: memref<1x32xf32, #tpu.memory_space<vmem>>, %arg12: memref<2x8x32xf32, #tpu.memory_space<vmem>>) attributes {dimension_semantics = [#tpu.dimension_semantics<parallel>], iteration_bounds = array<i64: 1>, scalar_prefetch = 0 : i64, scratch_operands = 0 : i64, tpu.core_type = #tpu.core_type<tc>, window_params = [{transform_indices = @transform_0, window_bounds = array<i64: 2, 8, 32>}, {pipeline_mode = #tpu.pipeline_mode<synchronous>, transform_indices = @transform_1, window_bounds = array<i64: 32, 96>}, {pipeline_mode = #tpu.pipeline_mode<synchronous>, transform_indices = @transform_2, window_bounds = array<i64: 4, 8, 32>}, {pipeline_mode = #tpu.pipeline_mode<synchronous>, transform_indices = @transform_3, window_bounds = array<i64: 1, 32>}, {pipeline_mode = #tpu.pipeline_mode<synchronous>, transform_indices = @transform_4, window_bounds = array<i64: 1, 32>}, {pipeline_mode = #tpu.pipeline_mode<synchronous>, transform_indices = @transform_5, window_bounds = array<i64: 32, 64>}, {pipeline_mode = #tpu.pipeline_mode<synchronous>, transform_indices = @transform_6, window_bounds = array<i64: 1, 64>}, {pipeline_mode = #tpu.pipeline_mode<synchronous>, transform_indices = @transform_7, window_bounds = array<i64: 64, 32>}, {pipeline_mode = #tpu.pipeline_mode<synchronous>, transform_indices = @transform_8, window_bounds = array<i64: 1, 32>}, {pipeline_mode = #tpu.pipeline_mode<synchronous>, transform_indices = @transform_9, window_bounds = array<i64: 1, 32>}, {pipeline_mode = #tpu.pipeline_mode<synchronous>, transform_indices = @transform_10, window_bounds = array<i64: 1, 32>}, {transform_indices = @transform_11, window_bounds = array<i64: 2, 8, 32>}]} {
    %c0 = arith.constant 0 : index
    %c0_0 = arith.constant 0 : index
    %c0_1 = arith.constant 0 : index
    %0 = vector.load %arg1[%c0, %c0_0, %c0_1] : memref<2x8x32xbf16, #tpu.memory_space<vmem>>, vector<2x8x32xbf16>
    %1 = vector.shape_cast %0 : vector<2x8x32xbf16> to vector<16x32xbf16>
    %2 = arith.extf %1 : vector<16x32xbf16> to vector<16x32xf32>
    %c0_2 = arith.constant 0 : index
    %c0_3 = arith.constant 0 : index
    %3 = vector.load %arg2[%c0_2, %c0_3] : memref<32x96xbf16, #tpu.memory_space<vmem>>, vector<32x96xbf16>
    %cst = arith.constant dense<0.000000e+00> : vector<16x96xf32>
    %4 = tpu.matmul %1, %3, %cst {dimension_numbers = #tpu.dot_dimension_numbers<[1], [0], [0], [1], [0, 0, 1, 1], [], []>} : vector<16x32xbf16>, vector<32x96xbf16>, vector<16x96xf32> -> vector<16x96xf32>
    %cst_4 = arith.constant 0.000000e+00 : f32
    %5 = vector.broadcast %cst_4 : f32 to vector<8x32xf32>
    %6 = vector.extract_strided_slice %4 {offsets = [0, 0], sizes = [8, 8], strides = [1, 1]} : vector<16x96xf32> to vector<8x8xf32>
    %cst_5 = arith.constant 0.353553385 : f32
    %7 = vector.broadcast %cst_5 : f32 to vector<8x8xf32>
    %8 = arith.mulf %6, %7 : vector<8x8xf32>
    %9 = arith.truncf %8 : vector<8x8xf32> to vector<8x8xbf16>
    %10 = vector.extract_strided_slice %4 {offsets = [0, 32], sizes = [8, 8], strides = [1, 1]} : vector<16x96xf32> to vector<8x8xf32>
    %11 = arith.truncf %10 : vector<8x8xf32> to vector<8x8xbf16>
    %12 = vector.extract_strided_slice %4 {offsets = [0, 64], sizes = [8, 8], strides = [1, 1]} : vector<16x96xf32> to vector<8x8xf32>
    %13 = arith.truncf %12 : vector<8x8xf32> to vector<8x8xbf16>
    %14 = tpu.transpose %11, [1, 0] : vector<8x8xbf16> -> vector<8x8xbf16>
    %cst_6 = arith.constant dense<0.000000e+00> : vector<8x8xf32>
    %15 = tpu.matmul %9, %14, %cst_6 {dimension_numbers = #tpu.dot_dimension_numbers<[1], [0], [0], [1], [0, 0, 1, 1], [], []>} : vector<8x8xbf16>, vector<8x8xbf16>, vector<8x8xf32> -> vector<8x8xf32>
    %cst_7 = arith.constant dense<0xFF800000> : vector<8xf32>
    %16 = vector.multi_reduction <maximumf>, %15, %cst_7 [1] : vector<8x8xf32> to vector<8xf32>
    %17 = vector.shape_cast %16 : vector<8xf32> to vector<8x1xf32>
    %18 = vector.broadcast %17 : vector<8x1xf32> to vector<8x8xf32>
    %19 = arith.subf %15, %18 : vector<8x8xf32>
    %20 = math.exp %19 : vector<8x8xf32>
    %cst_8 = arith.constant dense<0.000000e+00> : vector<8xf32>
    %21 = vector.multi_reduction <add>, %20, %cst_8 [1] : vector<8x8xf32> to vector<8xf32>
    %22 = vector.shape_cast %21 : vector<8xf32> to vector<8x1xf32>
    %23 = tpu.reciprocal %22 {approx = true} : vector<8x1xf32> -> vector<8x1xf32>
    %24 = vector.broadcast %23 : vector<8x1xf32> to vector<8x8xf32>
    %25 = arith.mulf %20, %24 : vector<8x8xf32>
    %26 = arith.truncf %25 : vector<8x8xf32> to vector<8x8xbf16>
    %cst_9 = arith.constant dense<0.000000e+00> : vector<8x8xf32>
    %27 = tpu.matmul %26, %13, %cst_9 {dimension_numbers = #tpu.dot_dimension_numbers<[1], [0], [0], [1], [0, 0, 1, 1], [], []>} : vector<8x8xbf16>, vector<8x8xbf16>, vector<8x8xf32> -> vector<8x8xf32>
    %28 = arith.truncf %27 : vector<8x8xf32> to vector<8x8xbf16>
    %c0_10 = arith.constant 0 : index
    %c0_11 = arith.constant 0 : index
    %c0_12 = arith.constant 0 : index
    %29 = vector.load %arg3[%c0_10, %c0_11, %c0_12] : memref<4x8x32xbf16, #tpu.memory_space<vmem>>, vector<1x8x32xbf16>
    %30 = vector.shape_cast %29 : vector<1x8x32xbf16> to vector<8x32xbf16>
    %cst_13 = arith.constant dense<0.000000e+00> : vector<8x32xf32>
    %31 = tpu.matmul %28, %30, %cst_13 {dimension_numbers = #tpu.dot_dimension_numbers<[1], [0], [0], [1], [0, 0, 1, 1], [], []>} : vector<8x8xbf16>, vector<8x32xbf16>, vector<8x32xf32> -> vector<8x32xf32>
    %32 = arith.addf %5, %31 : vector<8x32xf32>
    %33 = vector.extract_strided_slice %4 {offsets = [0, 8], sizes = [8, 8], strides = [1, 1]} : vector<16x96xf32> to vector<8x8xf32>
    %cst_14 = arith.constant 0.353553385 : f32
    %34 = vector.broadcast %cst_14 : f32 to vector<8x8xf32>
    %35 = arith.mulf %33, %34 : vector<8x8xf32>
    %36 = arith.truncf %35 : vector<8x8xf32> to vector<8x8xbf16>
    %37 = vector.extract_strided_slice %4 {offsets = [0, 40], sizes = [8, 8], strides = [1, 1]} : vector<16x96xf32> to vector<8x8xf32>
    %38 = arith.truncf %37 : vector<8x8xf32> to vector<8x8xbf16>
    %39 = vector.extract_strided_slice %4 {offsets = [0, 72], sizes = [8, 8], strides = [1, 1]} : vector<16x96xf32> to vector<8x8xf32>
    %40 = arith.truncf %39 : vector<8x8xf32> to vector<8x8xbf16>
    %41 = tpu.transpose %38, [1, 0] : vector<8x8xbf16> -> vector<8x8xbf16>
    %cst_15 = arith.constant dense<0.000000e+00> : vector<8x8xf32>
    %42 = tpu.matmul %36, %41, %cst_15 {dimension_numbers = #tpu.dot_dimension_numbers<[1], [0], [0], [1], [0, 0, 1, 1], [], []>} : vector<8x8xbf16>, vector<8x8xbf16>, vector<8x8xf32> -> vector<8x8xf32>
    %cst_16 = arith.constant dense<0xFF800000> : vector<8xf32>
    %43 = vector.multi_reduction <maximumf>, %42, %cst_16 [1] : vector<8x8xf32> to vector<8xf32>
    %44 = vector.shape_cast %43 : vector<8xf32> to vector<8x1xf32>
    %45 = vector.broadcast %44 : vector<8x1xf32> to vector<8x8xf32>
    %46 = arith.subf %42, %45 : vector<8x8xf32>
    %47 = math.exp %46 : vector<8x8xf32>
    %cst_17 = arith.constant dense<0.000000e+00> : vector<8xf32>
    %48 = vector.multi_reduction <add>, %47, %cst_17 [1] : vector<8x8xf32> to vector<8xf32>
    %49 = vector.shape_cast %48 : vector<8xf32> to vector<8x1xf32>
    %50 = tpu.reciprocal %49 {approx = true} : vector<8x1xf32> -> vector<8x1xf32>
    %51 = vector.broadcast %50 : vector<8x1xf32> to vector<8x8xf32>
    %52 = arith.mulf %47, %51 : vector<8x8xf32>
    %53 = arith.truncf %52 : vector<8x8xf32> to vector<8x8xbf16>
    %cst_18 = arith.constant dense<0.000000e+00> : vector<8x8xf32>
    %54 = tpu.matmul %53, %40, %cst_18 {dimension_numbers = #tpu.dot_dimension_numbers<[1], [0], [0], [1], [0, 0, 1, 1], [], []>} : vector<8x8xbf16>, vector<8x8xbf16>, vector<8x8xf32> -> vector<8x8xf32>
    %55 = arith.truncf %54 : vector<8x8xf32> to vector<8x8xbf16>
    %c1 = arith.constant 1 : index
    %c0_19 = arith.constant 0 : index
    %c0_20 = arith.constant 0 : index
    %56 = vector.load %arg3[%c1, %c0_19, %c0_20] : memref<4x8x32xbf16, #tpu.memory_space<vmem>>, vector<1x8x32xbf16>
    %57 = vector.shape_cast %56 : vector<1x8x32xbf16> to vector<8x32xbf16>
    %cst_21 = arith.constant dense<0.000000e+00> : vector<8x32xf32>
    %58 = tpu.matmul %55, %57, %cst_21 {dimension_numbers = #tpu.dot_dimension_numbers<[1], [0], [0], [1], [0, 0, 1, 1], [], []>} : vector<8x8xbf16>, vector<8x32xbf16>, vector<8x32xf32> -> vector<8x32xf32>
    %59 = arith.addf %32, %58 : vector<8x32xf32>
    %60 = vector.extract_strided_slice %4 {offsets = [0, 16], sizes = [8, 8], strides = [1, 1]} : vector<16x96xf32> to vector<8x8xf32>
    %cst_22 = arith.constant 0.353553385 : f32
    %61 = vector.broadcast %cst_22 : f32 to vector<8x8xf32>
    %62 = arith.mulf %60, %61 : vector<8x8xf32>
    %63 = arith.truncf %62 : vector<8x8xf32> to vector<8x8xbf16>
    %64 = vector.extract_strided_slice %4 {offsets = [0, 48], sizes = [8, 8], strides = [1, 1]} : vector<16x96xf32> to vector<8x8xf32>
    %65 = arith.truncf %64 : vector<8x8xf32> to vector<8x8xbf16>
    %66 = vector.extract_strided_slice %4 {offsets = [0, 80], sizes = [8, 8], strides = [1, 1]} : vector<16x96xf32> to vector<8x8xf32>
    %67 = arith.truncf %66 : vector<8x8xf32> to vector<8x8xbf16>
    %68 = tpu.transpose %65, [1, 0] : vector<8x8xbf16> -> vector<8x8xbf16>
    %cst_23 = arith.constant dense<0.000000e+00> : vector<8x8xf32>
    %69 = tpu.matmul %63, %68, %cst_23 {dimension_numbers = #tpu.dot_dimension_numbers<[1], [0], [0], [1], [0, 0, 1, 1], [], []>} : vector<8x8xbf16>, vector<8x8xbf16>, vector<8x8xf32> -> vector<8x8xf32>
    %cst_24 = arith.constant dense<0xFF800000> : vector<8xf32>
    %70 = vector.multi_reduction <maximumf>, %69, %cst_24 [1] : vector<8x8xf32> to vector<8xf32>
    %71 = vector.shape_cast %70 : vector<8xf32> to vector<8x1xf32>
    %72 = vector.broadcast %71 : vector<8x1xf32> to vector<8x8xf32>
    %73 = arith.subf %69, %72 : vector<8x8xf32>
    %74 = math.exp %73 : vector<8x8xf32>
    %cst_25 = arith.constant dense<0.000000e+00> : vector<8xf32>
    %75 = vector.multi_reduction <add>, %74, %cst_25 [1] : vector<8x8xf32> to vector<8xf32>
    %76 = vector.shape_cast %75 : vector<8xf32> to vector<8x1xf32>
    %77 = tpu.reciprocal %76 {approx = true} : vector<8x1xf32> -> vector<8x1xf32>
    %78 = vector.broadcast %77 : vector<8x1xf32> to vector<8x8xf32>
    %79 = arith.mulf %74, %78 : vector<8x8xf32>
    %80 = arith.truncf %79 : vector<8x8xf32> to vector<8x8xbf16>
    %cst_26 = arith.constant dense<0.000000e+00> : vector<8x8xf32>
    %81 = tpu.matmul %80, %67, %cst_26 {dimension_numbers = #tpu.dot_dimension_numbers<[1], [0], [0], [1], [0, 0, 1, 1], [], []>} : vector<8x8xbf16>, vector<8x8xbf16>, vector<8x8xf32> -> vector<8x8xf32>
    %82 = arith.truncf %81 : vector<8x8xf32> to vector<8x8xbf16>
    %c2 = arith.constant 2 : index
    %c0_27 = arith.constant 0 : index
    %c0_28 = arith.constant 0 : index
    %83 = vector.load %arg3[%c2, %c0_27, %c0_28] : memref<4x8x32xbf16, #tpu.memory_space<vmem>>, vector<1x8x32xbf16>
    %84 = vector.shape_cast %83 : vector<1x8x32xbf16> to vector<8x32xbf16>
    %cst_29 = arith.constant dense<0.000000e+00> : vector<8x32xf32>
    %85 = tpu.matmul %82, %84, %cst_29 {dimension_numbers = #tpu.dot_dimension_numbers<[1], [0], [0], [1], [0, 0, 1, 1], [], []>} : vector<8x8xbf16>, vector<8x32xbf16>, vector<8x32xf32> -> vector<8x32xf32>
    %86 = arith.addf %59, %85 : vector<8x32xf32>
    %87 = vector.extract_strided_slice %4 {offsets = [0, 24], sizes = [8, 8], strides = [1, 1]} : vector<16x96xf32> to vector<8x8xf32>
    %cst_30 = arith.constant 0.353553385 : f32
    %88 = vector.broadcast %cst_30 : f32 to vector<8x8xf32>
    %89 = arith.mulf %87, %88 : vector<8x8xf32>
    %90 = arith.truncf %89 : vector<8x8xf32> to vector<8x8xbf16>
    %91 = vector.extract_strided_slice %4 {offsets = [0, 56], sizes = [8, 8], strides = [1, 1]} : vector<16x96xf32> to vector<8x8xf32>
    %92 = arith.truncf %91 : vector<8x8xf32> to vector<8x8xbf16>
    %93 = vector.extract_strided_slice %4 {offsets = [0, 88], sizes = [8, 8], strides = [1, 1]} : vector<16x96xf32> to vector<8x8xf32>
    %94 = arith.truncf %93 : vector<8x8xf32> to vector<8x8xbf16>
    %95 = tpu.transpose %92, [1, 0] : vector<8x8xbf16> -> vector<8x8xbf16>
    %cst_31 = arith.constant dense<0.000000e+00> : vector<8x8xf32>
    %96 = tpu.matmul %90, %95, %cst_31 {dimension_numbers = #tpu.dot_dimension_numbers<[1], [0], [0], [1], [0, 0, 1, 1], [], []>} : vector<8x8xbf16>, vector<8x8xbf16>, vector<8x8xf32> -> vector<8x8xf32>
    %cst_32 = arith.constant dense<0xFF800000> : vector<8xf32>
    %97 = vector.multi_reduction <maximumf>, %96, %cst_32 [1] : vector<8x8xf32> to vector<8xf32>
    %98 = vector.shape_cast %97 : vector<8xf32> to vector<8x1xf32>
    %99 = vector.broadcast %98 : vector<8x1xf32> to vector<8x8xf32>
    %100 = arith.subf %96, %99 : vector<8x8xf32>
    %101 = math.exp %100 : vector<8x8xf32>
    %cst_33 = arith.constant dense<0.000000e+00> : vector<8xf32>
    %102 = vector.multi_reduction <add>, %101, %cst_33 [1] : vector<8x8xf32> to vector<8xf32>
    %103 = vector.shape_cast %102 : vector<8xf32> to vector<8x1xf32>
    %104 = tpu.reciprocal %103 {approx = true} : vector<8x1xf32> -> vector<8x1xf32>
    %105 = vector.broadcast %104 : vector<8x1xf32> to vector<8x8xf32>
    %106 = arith.mulf %101, %105 : vector<8x8xf32>
    %107 = arith.truncf %106 : vector<8x8xf32> to vector<8x8xbf16>
    %cst_34 = arith.constant dense<0.000000e+00> : vector<8x8xf32>
    %108 = tpu.matmul %107, %94, %cst_34 {dimension_numbers = #tpu.dot_dimension_numbers<[1], [0], [0], [1], [0, 0, 1, 1], [], []>} : vector<8x8xbf16>, vector<8x8xbf16>, vector<8x8xf32> -> vector<8x8xf32>
    %109 = arith.truncf %108 : vector<8x8xf32> to vector<8x8xbf16>
    %c3 = arith.constant 3 : index
    %c0_35 = arith.constant 0 : index
    %c0_36 = arith.constant 0 : index
    %110 = vector.load %arg3[%c3, %c0_35, %c0_36] : memref<4x8x32xbf16, #tpu.memory_space<vmem>>, vector<1x8x32xbf16>
    %111 = vector.shape_cast %110 : vector<1x8x32xbf16> to vector<8x32xbf16>
    %cst_37 = arith.constant dense<0.000000e+00> : vector<8x32xf32>
    %112 = tpu.matmul %109, %111, %cst_37 {dimension_numbers = #tpu.dot_dimension_numbers<[1], [0], [0], [1], [0, 0, 1, 1], [], []>} : vector<8x8xbf16>, vector<8x32xbf16>, vector<8x32xf32> -> vector<8x32xf32>
    %113 = arith.addf %86, %112 : vector<8x32xf32>
    %cst_38 = arith.constant 0.000000e+00 : f32
    %114 = vector.broadcast %cst_38 : f32 to vector<8x32xf32>
    %115 = vector.extract_strided_slice %4 {offsets = [8, 0], sizes = [8, 8], strides = [1, 1]} : vector<16x96xf32> to vector<8x8xf32>
    %cst_39 = arith.constant 0.353553385 : f32
    %116 = vector.broadcast %cst_39 : f32 to vector<8x8xf32>
    %117 = arith.mulf %115, %116 : vector<8x8xf32>
    %118 = arith.truncf %117 : vector<8x8xf32> to vector<8x8xbf16>
    %119 = vector.extract_strided_slice %4 {offsets = [8, 32], sizes = [8, 8], strides = [1, 1]} : vector<16x96xf32> to vector<8x8xf32>
    %120 = arith.truncf %119 : vector<8x8xf32> to vector<8x8xbf16>
    %121 = vector.extract_strided_slice %4 {offsets = [8, 64], sizes = [8, 8], strides = [1, 1]} : vector<16x96xf32> to vector<8x8xf32>
    %122 = arith.truncf %121 : vector<8x8xf32> to vector<8x8xbf16>
    %123 = tpu.transpose %120, [1, 0] : vector<8x8xbf16> -> vector<8x8xbf16>
    %cst_40 = arith.constant dense<0.000000e+00> : vector<8x8xf32>
    %124 = tpu.matmul %118, %123, %cst_40 {dimension_numbers = #tpu.dot_dimension_numbers<[1], [0], [0], [1], [0, 0, 1, 1], [], []>} : vector<8x8xbf16>, vector<8x8xbf16>, vector<8x8xf32> -> vector<8x8xf32>
    %cst_41 = arith.constant dense<0xFF800000> : vector<8xf32>
    %125 = vector.multi_reduction <maximumf>, %124, %cst_41 [1] : vector<8x8xf32> to vector<8xf32>
    %126 = vector.shape_cast %125 : vector<8xf32> to vector<8x1xf32>
    %127 = vector.broadcast %126 : vector<8x1xf32> to vector<8x8xf32>
    %128 = arith.subf %124, %127 : vector<8x8xf32>
    %129 = math.exp %128 : vector<8x8xf32>
    %cst_42 = arith.constant dense<0.000000e+00> : vector<8xf32>
    %130 = vector.multi_reduction <add>, %129, %cst_42 [1] : vector<8x8xf32> to vector<8xf32>
    %131 = vector.shape_cast %130 : vector<8xf32> to vector<8x1xf32>
    %132 = tpu.reciprocal %131 {approx = true} : vector<8x1xf32> -> vector<8x1xf32>
    %133 = vector.broadcast %132 : vector<8x1xf32> to vector<8x8xf32>
    %134 = arith.mulf %129, %133 : vector<8x8xf32>
    %135 = arith.truncf %134 : vector<8x8xf32> to vector<8x8xbf16>
    %cst_43 = arith.constant dense<0.000000e+00> : vector<8x8xf32>
    %136 = tpu.matmul %135, %122, %cst_43 {dimension_numbers = #tpu.dot_dimension_numbers<[1], [0], [0], [1], [0, 0, 1, 1], [], []>} : vector<8x8xbf16>, vector<8x8xbf16>, vector<8x8xf32> -> vector<8x8xf32>
    %137 = arith.truncf %136 : vector<8x8xf32> to vector<8x8xbf16>
    %c0_44 = arith.constant 0 : index
    %c0_45 = arith.constant 0 : index
    %c0_46 = arith.constant 0 : index
    %138 = vector.load %arg3[%c0_44, %c0_45, %c0_46] : memref<4x8x32xbf16, #tpu.memory_space<vmem>>, vector<1x8x32xbf16>
    %139 = vector.shape_cast %138 : vector<1x8x32xbf16> to vector<8x32xbf16>
    %cst_47 = arith.constant dense<0.000000e+00> : vector<8x32xf32>
    %140 = tpu.matmul %137, %139, %cst_47 {dimension_numbers = #tpu.dot_dimension_numbers<[1], [0], [0], [1], [0, 0, 1, 1], [], []>} : vector<8x8xbf16>, vector<8x32xbf16>, vector<8x32xf32> -> vector<8x32xf32>
    %141 = arith.addf %114, %140 : vector<8x32xf32>
    %142 = vector.extract_strided_slice %4 {offsets = [8, 8], sizes = [8, 8], strides = [1, 1]} : vector<16x96xf32> to vector<8x8xf32>
    %cst_48 = arith.constant 0.353553385 : f32
    %143 = vector.broadcast %cst_48 : f32 to vector<8x8xf32>
    %144 = arith.mulf %142, %143 : vector<8x8xf32>
    %145 = arith.truncf %144 : vector<8x8xf32> to vector<8x8xbf16>
    %146 = vector.extract_strided_slice %4 {offsets = [8, 40], sizes = [8, 8], strides = [1, 1]} : vector<16x96xf32> to vector<8x8xf32>
    %147 = arith.truncf %146 : vector<8x8xf32> to vector<8x8xbf16>
    %148 = vector.extract_strided_slice %4 {offsets = [8, 72], sizes = [8, 8], strides = [1, 1]} : vector<16x96xf32> to vector<8x8xf32>
    %149 = arith.truncf %148 : vector<8x8xf32> to vector<8x8xbf16>
    %150 = tpu.transpose %147, [1, 0] : vector<8x8xbf16> -> vector<8x8xbf16>
    %cst_49 = arith.constant dense<0.000000e+00> : vector<8x8xf32>
    %151 = tpu.matmul %145, %150, %cst_49 {dimension_numbers = #tpu.dot_dimension_numbers<[1], [0], [0], [1], [0, 0, 1, 1], [], []>} : vector<8x8xbf16>, vector<8x8xbf16>, vector<8x8xf32> -> vector<8x8xf32>
    %cst_50 = arith.constant dense<0xFF800000> : vector<8xf32>
    %152 = vector.multi_reduction <maximumf>, %151, %cst_50 [1] : vector<8x8xf32> to vector<8xf32>
    %153 = vector.shape_cast %152 : vector<8xf32> to vector<8x1xf32>
    %154 = vector.broadcast %153 : vector<8x1xf32> to vector<8x8xf32>
    %155 = arith.subf %151, %154 : vector<8x8xf32>
    %156 = math.exp %155 : vector<8x8xf32>
    %cst_51 = arith.constant dense<0.000000e+00> : vector<8xf32>
    %157 = vector.multi_reduction <add>, %156, %cst_51 [1] : vector<8x8xf32> to vector<8xf32>
    %158 = vector.shape_cast %157 : vector<8xf32> to vector<8x1xf32>
    %159 = tpu.reciprocal %158 {approx = true} : vector<8x1xf32> -> vector<8x1xf32>
    %160 = vector.broadcast %159 : vector<8x1xf32> to vector<8x8xf32>
    %161 = arith.mulf %156, %160 : vector<8x8xf32>
    %162 = arith.truncf %161 : vector<8x8xf32> to vector<8x8xbf16>
    %cst_52 = arith.constant dense<0.000000e+00> : vector<8x8xf32>
    %163 = tpu.matmul %162, %149, %cst_52 {dimension_numbers = #tpu.dot_dimension_numbers<[1], [0], [0], [1], [0, 0, 1, 1], [], []>} : vector<8x8xbf16>, vector<8x8xbf16>, vector<8x8xf32> -> vector<8x8xf32>
    %164 = arith.truncf %163 : vector<8x8xf32> to vector<8x8xbf16>
    %c1_53 = arith.constant 1 : index
    %c0_54 = arith.constant 0 : index
    %c0_55 = arith.constant 0 : index
    %165 = vector.load %arg3[%c1_53, %c0_54, %c0_55] : memref<4x8x32xbf16, #tpu.memory_space<vmem>>, vector<1x8x32xbf16>
    %166 = vector.shape_cast %165 : vector<1x8x32xbf16> to vector<8x32xbf16>
    %cst_56 = arith.constant dense<0.000000e+00> : vector<8x32xf32>
    %167 = tpu.matmul %164, %166, %cst_56 {dimension_numbers = #tpu.dot_dimension_numbers<[1], [0], [0], [1], [0, 0, 1, 1], [], []>} : vector<8x8xbf16>, vector<8x32xbf16>, vector<8x32xf32> -> vector<8x32xf32>
    %168 = arith.addf %141, %167 : vector<8x32xf32>
    %169 = vector.extract_strided_slice %4 {offsets = [8, 16], sizes = [8, 8], strides = [1, 1]} : vector<16x96xf32> to vector<8x8xf32>
    %cst_57 = arith.constant 0.353553385 : f32
    %170 = vector.broadcast %cst_57 : f32 to vector<8x8xf32>
    %171 = arith.mulf %169, %170 : vector<8x8xf32>
    %172 = arith.truncf %171 : vector<8x8xf32> to vector<8x8xbf16>
    %173 = vector.extract_strided_slice %4 {offsets = [8, 48], sizes = [8, 8], strides = [1, 1]} : vector<16x96xf32> to vector<8x8xf32>
    %174 = arith.truncf %173 : vector<8x8xf32> to vector<8x8xbf16>
    %175 = vector.extract_strided_slice %4 {offsets = [8, 80], sizes = [8, 8], strides = [1, 1]} : vector<16x96xf32> to vector<8x8xf32>
    %176 = arith.truncf %175 : vector<8x8xf32> to vector<8x8xbf16>
    %177 = tpu.transpose %174, [1, 0] : vector<8x8xbf16> -> vector<8x8xbf16>
    %cst_58 = arith.constant dense<0.000000e+00> : vector<8x8xf32>
    %178 = tpu.matmul %172, %177, %cst_58 {dimension_numbers = #tpu.dot_dimension_numbers<[1], [0], [0], [1], [0, 0, 1, 1], [], []>} : vector<8x8xbf16>, vector<8x8xbf16>, vector<8x8xf32> -> vector<8x8xf32>
    %cst_59 = arith.constant dense<0xFF800000> : vector<8xf32>
    %179 = vector.multi_reduction <maximumf>, %178, %cst_59 [1] : vector<8x8xf32> to vector<8xf32>
    %180 = vector.shape_cast %179 : vector<8xf32> to vector<8x1xf32>
    %181 = vector.broadcast %180 : vector<8x1xf32> to vector<8x8xf32>
    %182 = arith.subf %178, %181 : vector<8x8xf32>
    %183 = math.exp %182 : vector<8x8xf32>
    %cst_60 = arith.constant dense<0.000000e+00> : vector<8xf32>
    %184 = vector.multi_reduction <add>, %183, %cst_60 [1] : vector<8x8xf32> to vector<8xf32>
    %185 = vector.shape_cast %184 : vector<8xf32> to vector<8x1xf32>
    %186 = tpu.reciprocal %185 {approx = true} : vector<8x1xf32> -> vector<8x1xf32>
    %187 = vector.broadcast %186 : vector<8x1xf32> to vector<8x8xf32>
    %188 = arith.mulf %183, %187 : vector<8x8xf32>
    %189 = arith.truncf %188 : vector<8x8xf32> to vector<8x8xbf16>
    %cst_61 = arith.constant dense<0.000000e+00> : vector<8x8xf32>
    %190 = tpu.matmul %189, %176, %cst_61 {dimension_numbers = #tpu.dot_dimension_numbers<[1], [0], [0], [1], [0, 0, 1, 1], [], []>} : vector<8x8xbf16>, vector<8x8xbf16>, vector<8x8xf32> -> vector<8x8xf32>
    %191 = arith.truncf %190 : vector<8x8xf32> to vector<8x8xbf16>
    %c2_62 = arith.constant 2 : index
    %c0_63 = arith.constant 0 : index
    %c0_64 = arith.constant 0 : index
    %192 = vector.load %arg3[%c2_62, %c0_63, %c0_64] : memref<4x8x32xbf16, #tpu.memory_space<vmem>>, vector<1x8x32xbf16>
    %193 = vector.shape_cast %192 : vector<1x8x32xbf16> to vector<8x32xbf16>
    %cst_65 = arith.constant dense<0.000000e+00> : vector<8x32xf32>
    %194 = tpu.matmul %191, %193, %cst_65 {dimension_numbers = #tpu.dot_dimension_numbers<[1], [0], [0], [1], [0, 0, 1, 1], [], []>} : vector<8x8xbf16>, vector<8x32xbf16>, vector<8x32xf32> -> vector<8x32xf32>
    %195 = arith.addf %168, %194 : vector<8x32xf32>
    %196 = vector.extract_strided_slice %4 {offsets = [8, 24], sizes = [8, 8], strides = [1, 1]} : vector<16x96xf32> to vector<8x8xf32>
    %cst_66 = arith.constant 0.353553385 : f32
    %197 = vector.broadcast %cst_66 : f32 to vector<8x8xf32>
    %198 = arith.mulf %196, %197 : vector<8x8xf32>
    %199 = arith.truncf %198 : vector<8x8xf32> to vector<8x8xbf16>
    %200 = vector.extract_strided_slice %4 {offsets = [8, 56], sizes = [8, 8], strides = [1, 1]} : vector<16x96xf32> to vector<8x8xf32>
    %201 = arith.truncf %200 : vector<8x8xf32> to vector<8x8xbf16>
    %202 = vector.extract_strided_slice %4 {offsets = [8, 88], sizes = [8, 8], strides = [1, 1]} : vector<16x96xf32> to vector<8x8xf32>
    %203 = arith.truncf %202 : vector<8x8xf32> to vector<8x8xbf16>
    %204 = tpu.transpose %201, [1, 0] : vector<8x8xbf16> -> vector<8x8xbf16>
    %cst_67 = arith.constant dense<0.000000e+00> : vector<8x8xf32>
    %205 = tpu.matmul %199, %204, %cst_67 {dimension_numbers = #tpu.dot_dimension_numbers<[1], [0], [0], [1], [0, 0, 1, 1], [], []>} : vector<8x8xbf16>, vector<8x8xbf16>, vector<8x8xf32> -> vector<8x8xf32>
    %cst_68 = arith.constant dense<0xFF800000> : vector<8xf32>
    %206 = vector.multi_reduction <maximumf>, %205, %cst_68 [1] : vector<8x8xf32> to vector<8xf32>
    %207 = vector.shape_cast %206 : vector<8xf32> to vector<8x1xf32>
    %208 = vector.broadcast %207 : vector<8x1xf32> to vector<8x8xf32>
    %209 = arith.subf %205, %208 : vector<8x8xf32>
    %210 = math.exp %209 : vector<8x8xf32>
    %cst_69 = arith.constant dense<0.000000e+00> : vector<8xf32>
    %211 = vector.multi_reduction <add>, %210, %cst_69 [1] : vector<8x8xf32> to vector<8xf32>
    %212 = vector.shape_cast %211 : vector<8xf32> to vector<8x1xf32>
    %213 = tpu.reciprocal %212 {approx = true} : vector<8x1xf32> -> vector<8x1xf32>
    %214 = vector.broadcast %213 : vector<8x1xf32> to vector<8x8xf32>
    %215 = arith.mulf %210, %214 : vector<8x8xf32>
    %216 = arith.truncf %215 : vector<8x8xf32> to vector<8x8xbf16>
    %cst_70 = arith.constant dense<0.000000e+00> : vector<8x8xf32>
    %217 = tpu.matmul %216, %203, %cst_70 {dimension_numbers = #tpu.dot_dimension_numbers<[1], [0], [0], [1], [0, 0, 1, 1], [], []>} : vector<8x8xbf16>, vector<8x8xbf16>, vector<8x8xf32> -> vector<8x8xf32>
    %218 = arith.truncf %217 : vector<8x8xf32> to vector<8x8xbf16>
    %c3_71 = arith.constant 3 : index
    %c0_72 = arith.constant 0 : index
    %c0_73 = arith.constant 0 : index
    %219 = vector.load %arg3[%c3_71, %c0_72, %c0_73] : memref<4x8x32xbf16, #tpu.memory_space<vmem>>, vector<1x8x32xbf16>
    %220 = vector.shape_cast %219 : vector<1x8x32xbf16> to vector<8x32xbf16>
    %cst_74 = arith.constant dense<0.000000e+00> : vector<8x32xf32>
    %221 = tpu.matmul %218, %220, %cst_74 {dimension_numbers = #tpu.dot_dimension_numbers<[1], [0], [0], [1], [0, 0, 1, 1], [], []>} : vector<8x8xbf16>, vector<8x32xbf16>, vector<8x32xf32> -> vector<8x32xf32>
    %222 = arith.addf %195, %221 : vector<8x32xf32>
    %223 = tpu.concatenate %113, %222 in 0 : vector<8x32xf32>, vector<8x32xf32> -> vector<16x32xf32>
    %224 = arith.addf %223, %2 : vector<16x32xf32>
    %c0_75 = arith.constant 0 : index
    %c0_76 = arith.constant 0 : index
    %225 = vector.load %arg4[%c0_75, %c0_76] : memref<1x32xf32, #tpu.memory_space<vmem>>, vector<1x32xf32>
    %c0_77 = arith.constant 0 : index
    %c0_78 = arith.constant 0 : index
    %226 = vector.load %arg5[%c0_77, %c0_78] : memref<1x32xf32, #tpu.memory_space<vmem>>, vector<1x32xf32>
    %cst_79 = arith.constant dense<0.000000e+00> : vector<16xf32>
    %227 = vector.multi_reduction <add>, %224, %cst_79 [1] : vector<16x32xf32> to vector<16xf32>
    %228 = vector.shape_cast %227 : vector<16xf32> to vector<16x1xf32>
    %cst_80 = arith.constant 3.200000e+01 : f32
    %229 = vector.broadcast %cst_80 : f32 to vector<16x1xf32>
    %230 = arith.divf %228, %229 : vector<16x1xf32>
    %231 = vector.broadcast %230 : vector<16x1xf32> to vector<16x32xf32>
    %232 = arith.subf %224, %231 : vector<16x32xf32>
    %233 = arith.mulf %232, %232 : vector<16x32xf32>
    %cst_81 = arith.constant dense<0.000000e+00> : vector<16xf32>
    %234 = vector.multi_reduction <add>, %233, %cst_81 [1] : vector<16x32xf32> to vector<16xf32>
    %235 = vector.shape_cast %234 : vector<16xf32> to vector<16x1xf32>
    %cst_82 = arith.constant 3.200000e+01 : f32
    %236 = vector.broadcast %cst_82 : f32 to vector<16x1xf32>
    %237 = arith.divf %235, %236 : vector<16x1xf32>
    %238 = vector.broadcast %230 : vector<16x1xf32> to vector<16x32xf32>
    %239 = arith.subf %224, %238 : vector<16x32xf32>
    %cst_83 = arith.constant 9.99999974E-6 : f32
    %240 = vector.broadcast %cst_83 : f32 to vector<16x1xf32>
    %241 = arith.addf %237, %240 : vector<16x1xf32>
    %242 = math.rsqrt %241 : vector<16x1xf32>
    %243 = vector.broadcast %242 : vector<16x1xf32> to vector<16x32xf32>
    %244 = arith.mulf %239, %243 : vector<16x32xf32>
    %245 = vector.broadcast %225 : vector<1x32xf32> to vector<16x32xf32>
    %246 = arith.mulf %244, %245 : vector<16x32xf32>
    %247 = vector.broadcast %226 : vector<1x32xf32> to vector<16x32xf32>
    %248 = arith.addf %246, %247 : vector<16x32xf32>
    %249 = arith.truncf %248 : vector<16x32xf32> to vector<16x32xbf16>
    %c0_84 = arith.constant 0 : index
    %c0_85 = arith.constant 0 : index
    %250 = vector.load %arg6[%c0_84, %c0_85] : memref<32x64xbf16, #tpu.memory_space<vmem>>, vector<32x64xbf16>
    %cst_86 = arith.constant dense<0.000000e+00> : vector<16x64xf32>
    %251 = tpu.matmul %249, %250, %cst_86 {dimension_numbers = #tpu.dot_dimension_numbers<[1], [0], [0], [1], [0, 0, 1, 1], [], []>} : vector<16x32xbf16>, vector<32x64xbf16>, vector<16x64xf32> -> vector<16x64xf32>
    %c0_87 = arith.constant 0 : index
    %c0_88 = arith.constant 0 : index
    %252 = vector.load %arg7[%c0_87, %c0_88] : memref<1x64xf32, #tpu.memory_space<vmem>>, vector<1x64xf32>
    %253 = vector.broadcast %252 : vector<1x64xf32> to vector<16x64xf32>
    %254 = arith.addf %251, %253 : vector<16x64xf32>
    %cst_89 = arith.constant 0.000000e+00 : f32
    %255 = vector.broadcast %cst_89 : f32 to vector<16x64xf32>
    %256 = arith.maximumf %254, %255 : vector<16x64xf32>
    %257 = arith.truncf %256 : vector<16x64xf32> to vector<16x64xbf16>
    %c0_90 = arith.constant 0 : index
    %c0_91 = arith.constant 0 : index
    %258 = vector.load %arg8[%c0_90, %c0_91] : memref<64x32xbf16, #tpu.memory_space<vmem>>, vector<64x32xbf16>
    %cst_92 = arith.constant dense<0.000000e+00> : vector<16x32xf32>
    %259 = tpu.matmul %257, %258, %cst_92 {dimension_numbers = #tpu.dot_dimension_numbers<[1], [0], [0], [1], [0, 0, 1, 1], [], []>} : vector<16x64xbf16>, vector<64x32xbf16>, vector<16x32xf32> -> vector<16x32xf32>
    %c0_93 = arith.constant 0 : index
    %c0_94 = arith.constant 0 : index
    %260 = vector.load %arg9[%c0_93, %c0_94] : memref<1x32xf32, #tpu.memory_space<vmem>>, vector<1x32xf32>
    %261 = vector.broadcast %260 : vector<1x32xf32> to vector<16x32xf32>
    %262 = arith.addf %259, %261 : vector<16x32xf32>
    %263 = arith.addf %262, %248 : vector<16x32xf32>
    %c0_95 = arith.constant 0 : index
    %c0_96 = arith.constant 0 : index
    %264 = vector.load %arg10[%c0_95, %c0_96] : memref<1x32xf32, #tpu.memory_space<vmem>>, vector<1x32xf32>
    %c0_97 = arith.constant 0 : index
    %c0_98 = arith.constant 0 : index
    %265 = vector.load %arg11[%c0_97, %c0_98] : memref<1x32xf32, #tpu.memory_space<vmem>>, vector<1x32xf32>
    %cst_99 = arith.constant dense<0.000000e+00> : vector<16xf32>
    %266 = vector.multi_reduction <add>, %263, %cst_99 [1] : vector<16x32xf32> to vector<16xf32>
    %267 = vector.shape_cast %266 : vector<16xf32> to vector<16x1xf32>
    %cst_100 = arith.constant 3.200000e+01 : f32
    %268 = vector.broadcast %cst_100 : f32 to vector<16x1xf32>
    %269 = arith.divf %267, %268 : vector<16x1xf32>
    %270 = vector.broadcast %269 : vector<16x1xf32> to vector<16x32xf32>
    %271 = arith.subf %263, %270 : vector<16x32xf32>
    %272 = arith.mulf %271, %271 : vector<16x32xf32>
    %cst_101 = arith.constant dense<0.000000e+00> : vector<16xf32>
    %273 = vector.multi_reduction <add>, %272, %cst_101 [1] : vector<16x32xf32> to vector<16xf32>
    %274 = vector.shape_cast %273 : vector<16xf32> to vector<16x1xf32>
    %cst_102 = arith.constant 3.200000e+01 : f32
    %275 = vector.broadcast %cst_102 : f32 to vector<16x1xf32>
    %276 = arith.divf %274, %275 : vector<16x1xf32>
    %277 = vector.broadcast %269 : vector<16x1xf32> to vector<16x32xf32>
    %278 = arith.subf %263, %277 : vector<16x32xf32>
    %cst_103 = arith.constant 9.99999974E-6 : f32
    %279 = vector.broadcast %cst_103 : f32 to vector<16x1xf32>
    %280 = arith.addf %276, %279 : vector<16x1xf32>
    %281 = math.rsqrt %280 : vector<16x1xf32>
    %282 = vector.broadcast %281 : vector<16x1xf32> to vector<16x32xf32>
    %283 = arith.mulf %278, %282 : vector<16x32xf32>
    %284 = vector.broadcast %264 : vector<1x32xf32> to vector<16x32xf32>
    %285 = arith.mulf %283, %284 : vector<16x32xf32>
    %286 = vector.broadcast %265 : vector<1x32xf32> to vector<16x32xf32>
    %287 = arith.addf %285, %286 : vector<16x32xf32>
    %288 = vector.shape_cast %287 : vector<16x32xf32> to vector<2x8x32xf32>
    %c0_104 = arith.constant 0 : index
    %c0_105 = arith.constant 0 : index
    %c0_106 = arith.constant 0 : index
    %289 = vector.load %arg12[%c0_104, %c0_105, %c0_106] : memref<2x8x32xf32, #tpu.memory_space<vmem>>, vector<2x8x32xf32>
    tpu.vector_store %arg12[%c0_104, %c0_105, %c0_106], %288 {strides = array<i32>} : memref<2x8x32xf32, #tpu.memory_space<vmem>>, vector<2x8x32xf32>,
    return
  }
  func.func @transform_0(%arg0: i32) -> (i32, i32, i32) {
    %c0_i32 = arith.constant 0 : i32
    %c0_i32_0 = arith.constant 0 : i32
    %c0_i32_1 = arith.constant 0 : i32
    return %arg0, %c0_i32, %c0_i32_0 : i32, i32, i32
  }
  func.func @transform_1(%arg0: i32) -> (i32, i32) {
    %c0_i32 = arith.constant 0 : i32
    %c0_i32_0 = arith.constant 0 : i32
    %c0_i32_1 = arith.constant 0 : i32
    return %c0_i32, %c0_i32_0 : i32, i32
  }
  func.func @transform_2(%arg0: i32) -> (i32, i32, i32) {
    %c0_i32 = arith.constant 0 : i32
    %c0_i32_0 = arith.constant 0 : i32
    %c0_i32_1 = arith.constant 0 : i32
    %c0_i32_2 = arith.constant 0 : i32
    return %c0_i32, %c0_i32_0, %c0_i32_1 : i32, i32, i32
  }
  func.func @transform_3(%arg0: i32) -> (i32, i32) {
    %c0_i32 = arith.constant 0 : i32
    %c0_i32_0 = arith.constant 0 : i32
    %c0_i32_1 = arith.constant 0 : i32
    return %c0_i32, %c0_i32_0 : i32, i32
  }
  func.func @transform_4(%arg0: i32) -> (i32, i32) {
    %c0_i32 = arith.constant 0 : i32
    %c0_i32_0 = arith.constant 0 : i32
    %c0_i32_1 = arith.constant 0 : i32
    return %c0_i32, %c0_i32_0 : i32, i32
  }
  func.func @transform_5(%arg0: i32) -> (i32, i32) {
    %c0_i32 = arith.constant 0 : i32
    %c0_i32_0 = arith.constant 0 : i32
    %c0_i32_1 = arith.constant 0 : i32
    return %c0_i32, %c0_i32_0 : i32, i32
  }
  func.func @transform_6(%arg0: i32) -> (i32, i32) {
    %c0_i32 = arith.constant 0 : i32
    %c0_i32_0 = arith.constant 0 : i32
    %c0_i32_1 = arith.constant 0 : i32
    return %c0_i32, %c0_i32_0 : i32, i32
  }
  func.func @transform_7(%arg0: i32) -> (i32, i32) {
    %c0_i32 = arith.constant 0 : i32
    %c0_i32_0 = arith.constant 0 : i32
    %c0_i32_1 = arith.constant 0 : i32
    return %c0_i32, %c0_i32_0 : i32, i32
  }
  func.func @transform_8(%arg0: i32) -> (i32, i32) {
    %c0_i32 = arith.constant 0 : i32
    %c0_i32_0 = arith.constant 0 : i32
    %c0_i32_1 = arith.constant 0 : i32
    return %c0_i32, %c0_i32_0 : i32, i32
  }
  func.func @transform_9(%arg0: i32) -> (i32, i32) {
    %c0_i32 = arith.constant 0 : i32
    %c0_i32_0 = arith.constant 0 : i32
    %c0_i32_1 = arith.constant 0 : i32
    return %c0_i32, %c0_i32_0 : i32, i32
  }
  func.func @transform_10(%arg0: i32) -> (i32, i32) {
    %c0_i32 = arith.constant 0 : i32
    %c0_i32_0 = arith.constant 0 : i32
    %c0_i32_1 = arith.constant 0 : i32
    return %c0_i32, %c0_i32_0 : i32, i32
  }
  func.func @transform_11(%arg0: i32) -> (i32, i32, i32) {
    %c0_i32 = arith.constant 0 : i32
    %c0_i32_0 = arith.constant 0 : i32
    %c0_i32_1 = arith.constant 0 : i32
    return %arg0, %c0_i32, %c0_i32_0 : i32, i32, i32
  }
}

</mosaic_0001>

<llo_original>
// kernel: tpu_custom_call.1
$region0: #{tpu_custom_call.1}
  #allocation0 [shape = 'u32[]', space=smem, size = 0x4, offset = 0x4, fixed_abs, tag = 'smem constant byte address 0x4 - core index']
  #allocation1 [shape = 'u32[144,128]{1,0:T(1,128)}', space=vmem, size = 0x12000, scoped, tag = 'internal scratch']
  %s0 = inlined_call_operand.hbm [shape: bf16[2,8,32], index: 0, kind: input, shape index: {}]
  %s1 = inlined_call_operand.vmem [shape: bf16[32,96], index: 1, kind: input, shape index: {}]
  %s2 = inlined_call_operand.vmem [shape: bf16[4,8,32], index: 2, kind: input, shape index: {}]
  %s3 = inlined_call_operand.vmem [shape: f32[1,32], index: 3, kind: input, shape index: {}]
  %s4 = inlined_call_operand.vmem [shape: f32[1,32], index: 4, kind: input, shape index: {}]
  %s5 = inlined_call_operand.vmem [shape: bf16[32,64], index: 5, kind: input, shape index: {}]
  %s6 = inlined_call_operand.vmem [shape: f32[1,64], index: 6, kind: input, shape index: {}]
  %s7 = inlined_call_operand.vmem [shape: bf16[64,32], index: 7, kind: input, shape index: {}]
  %s8 = inlined_call_operand.vmem [shape: f32[1,32], index: 8, kind: input, shape index: {}]
  %s9 = inlined_call_operand.vmem [shape: f32[1,32], index: 9, kind: input, shape index: {}]
  %s10 = inlined_call_operand.vmem [shape: f32[1,32], index: 10, kind: input, shape index: {}]
  %s11 = inlined_call_operand.hbm [shape: f32[2,8,32], index: 11, kind: output, shape index: {}]
  %s12 = sld [smem:[#allocation0]]
  $region58: #{tpu_custom_call.1} parent=0
    _
  %s14 = ssub.s32 1, %s12
  %s15 = scalar_select 0, %s14, %s12
  $region1: #{tpu_custom_call.1} parent=0
    #allocation2 [shape = 'u8[4096]{0}', space=vmem, size = 0x1000, scoped, tag = 'input window, operand 0, single buffered']
    #allocation3 [shape = 's32[1]{0}', space=sflag, size = 0x4, scoped, tag = 'scoped memory for tpu_custom_call.1']
    #allocation4 [shape = 's32[1]{0}', space=sflag, size = 0x4, scoped, tag = 'scoped memory for tpu_custom_call.1']
    #allocation5 [shape = 'u8[8192]{0}', space=vmem, size = 0x2000, scoped, tag = 'output window, operand 0, single buffered']
    %16 = vsyncpa [#allocation3], 0
    %17 = vsyncpa [#allocation4], 0
    // Predicated region
    $region2: #{tpu_custom_call.1} parent=1 // pred_check
      _
    $region3: #{tpu_custom_call.1} parent=1 // pred_check_branch
      %19 = sbr.rel (0) target = $region5
    $region4: #{tpu_custom_call.1} parent=1 // pred_region
      %s21 = ssub.s32 128, 128
      %22 = vsyncadd [#allocation3], %s21
      %s23 = sshll.u32 [#allocation2], 4
      %s24 = int_to_ptr.vmem [resolvable:$true] %s23
      %29 = dma.hbm_to_vmem [thread:$0]  %s0, 128, %s24, [#allocation3], 64, 64, 4
    $region5: #{tpu_custom_call.1} parent=1 // pred_fallthru
      _
    // Predicated region
    $region6: #{tpu_custom_call.1} parent=1 // pred_check
      _
    $region7: #{tpu_custom_call.1} parent=1 // pred_check_branch
      %31 = sbr.rel (0) target = $region9
    $region8: #{tpu_custom_call.1} parent=1 // pred_region
      _
    $region9: #{tpu_custom_call.1} parent=1 // pred_fallthru
      _
    // Predicated region
    $region10: #{tpu_custom_call.1} parent=1 // pred_check
      _
    $region11: #{tpu_custom_call.1} parent=1 // pred_check_branch
      %33 = sbr.rel (0) target = $region13
    $region12: #{tpu_custom_call.1} parent=1 // pred_region
      _
    $region13: #{tpu_custom_call.1} parent=1 // pred_fallthru
      _
    // Predicated region
    $region14: #{tpu_custom_call.1} parent=1 // pred_check
      _
    $region15: #{tpu_custom_call.1} parent=1 // pred_check_branch
      %35 = sbr.rel (0) target = $region17
    $region16: #{tpu_custom_call.1} parent=1 // pred_region
      _
    $region17: #{tpu_custom_call.1} parent=1 // pred_fallthru
      _
    // Predicated region
    $region18: #{tpu_custom_call.1} parent=1 // pred_check
      _
    $region19: #{tpu_custom_call.1} parent=1 // pred_check_branch
      %37 = sbr.rel (0) target = $region21
    $region20: #{tpu_custom_call.1} parent=1 // pred_region
      _
    $region21: #{tpu_custom_call.1} parent=1 // pred_fallthru
      _
    // Predicated region
    $region22: #{tpu_custom_call.1} parent=1 // pred_check
      _
    $region23: #{tpu_custom_call.1} parent=1 // pred_check_branch
      %39 = sbr.rel (0) target = $region25
    $region24: #{tpu_custom_call.1} parent=1 // pred_region
      _
    $region25: #{tpu_custom_call.1} parent=1 // pred_fallthru
      _
    // Predicated region
    $region26: #{tpu_custom_call.1} parent=1 // pred_check
      _
    $region27: #{tpu_custom_call.1} parent=1 // pred_check_branch
      %41 = sbr.rel (0) target = $region29
    $region28: #{tpu_custom_call.1} parent=1 // pred_region
      _
    $region29: #{tpu_custom_call.1} parent=1 // pred_fallthru
      _
    // Predicated region
    $region30: #{tpu_custom_call.1} parent=1 // pred_check
      _
    $region31: #{tpu_custom_call.1} parent=1 // pred_check_branch
      %43 = sbr.rel (0) target = $region33
    $region32: #{tpu_custom_call.1} parent=1 // pred_region
      _
    $region33: #{tpu_custom_call.1} parent=1 // pred_fallthru
      _
    // Predicated region
    $region34: #{tpu_custom_call.1} parent=1 // pred_check
      _
    $region35: #{tpu_custom_call.1} parent=1 // pred_check_branch
      %45 = sbr.rel (0) target = $region37
    $region36: #{tpu_custom_call.1} parent=1 // pred_region
      _
    $region37: #{tpu_custom_call.1} parent=1 // pred_fallthru
      _
    // Predicated region
    $region38: #{tpu_custom_call.1} parent=1 // pred_check
      _
    $region39: #{tpu_custom_call.1} parent=1 // pred_check_branch
      %47 = sbr.rel (0) target = $region41
    $region40: #{tpu_custom_call.1} parent=1 // pred_region
      _
    $region41: #{tpu_custom_call.1} parent=1 // pred_fallthru
      _
    // Predicated region
    $region42: #{tpu_custom_call.1} parent=1 // pred_check
      _
    $region43: #{tpu_custom_call.1} parent=1 // pred_check_branch
      %49 = sbr.rel (0) target = $region45
    $region44: #{tpu_custom_call.1} parent=1 // pred_region
      _
    $region45: #{tpu_custom_call.1} parent=1 // pred_fallthru
      _
    // Predicated region
    $region46: #{tpu_custom_call.1} parent=1 // pred_check
      _
    $region47: #{tpu_custom_call.1} parent=1 // pred_check_branch
      %51 = sbr.rel (0) target = $region49
    $region48: #{tpu_custom_call.1} parent=1 // pred_region
      %52 = dma.done [#allocation3], 128
    $region49: #{tpu_custom_call.1} parent=1 // pred_fallthru
      _
    %v54 = vld [vmem:[#allocation2] sm:$0xf]
    %v55 = vld [vmem:[#allocation2 + $0x4] sm:$0xf]
    %v56 = vunpack.c.l.bf16 %v54
    %v57 = vunpack.c.l.bf16 %v55
    %v58 = vld [vmem:[%s1] sm:$0xf]
    %v59 = vld [vmem:[%s1 + $0x4] sm:$0xf]
    %v60 = vld [vmem:[%s1 + $0x8] sm:$0xf]
    %v61 = vld [vmem:[%s1 + $0xc] sm:$0xf]
    %v64 = vunpack.c.l.b16 %v54
    %v65 = vunpack.c.l.b16 %v55
    %v66 = vpack.c.b16 %v65, %v64
    %v71 = vunpack.c.l.b16 %v58
    %v72 = vunpack.c.l.b16 %v59
    %v73 = vunpack.c.l.b16 %v60
    %v74 = vunpack.c.l.b16 %v61
    %v75 = vpack.c.b16 %v72, %v71
    %v76 = vpack.c.b16 %v74, %v73
    %vm79 = vcmask 261120
    %v81 = vsel %vm79, %v66, 0
    %83 = vmatprep.subr.bf16.mxu0 0
    %84 = vmatpush1.bf16.msra.mxu0 %v75
    %85 = vmatprep.subr.bf16.mxu0 0
    %86 = vmatpush1.bf16.msra.mxu0 %v76
    %87 = vmatprep.subr.bf16.mxu0 0
    %88 = vmatpush1.bf16.msra.mxu0 0
    %89 = vmatprep.subr.bf16.mxu0 0
    %90 = vmatpush1.bf16.msra.mxu0 0
    %91 = vmatprep.subr.bf16.mxu0 0
    %92 = vmatpush1.bf16.msra.mxu0 0
    %93 = vmatprep.subr.bf16.mxu0 0
    %94 = vmatpush1.bf16.msra.mxu0 0
    %95 = vmatprep.subr.bf16.mxu0 0
    %96 = vmatpush1.bf16.msra.mxu0 0
    %97 = vmatprep.subr.bf16.mxu0 0
    %98 = vmatpush1.bf16.msra.mxu0 0
    %99 = vmatprep.subr.bf16.mxu0 0
    %100 = vmatpush1.bf16.msra.mxu0 0
    %101 = vmatprep.subr.bf16.mxu0 0
    %102 = vmatpush1.bf16.msra.mxu0 0
    %103 = vmatprep.subr.bf16.mxu0 0
    %104 = vmatpush1.bf16.msra.mxu0 0
    %105 = vmatprep.subr.bf16.mxu0 0
    %106 = vmatpush1.bf16.msra.mxu0 0
    %107 = vmatprep.subr.bf16.mxu0 0
    %108 = vmatpush1.bf16.msra.mxu0 0
    %109 = vmatprep.subr.bf16.mxu0 0
    %110 = vmatpush1.bf16.msra.mxu0 0
    %111 = vmatprep.subr.bf16.mxu0 0
    %112 = vmatpush1.bf16.msra.mxu0 0
    %113 = vmatprep.subr.bf16.mxu0 0
    %114 = vmatpush1.bf16.msra.mxu0 0
    %115 = vmatprep.mubr.bf16.mxu0 0
    %116 = vmatmul.mubr.bf16.gmra.mrb[0].mxu0 %v81
    %v117 = vpop.f32.mrb[0].mxu0
    %v118 = vadd.f32 0.0, %v117
    %v119 = vpop.f32.mrb[0].mxu0
    %v120 = vpop.f32.mrb[0].mxu0
    %v121 = vadd.f32 0.0, %v120
    %v122 = vpop.f32.mrb[0].mxu0
    %123 = vdwg.mxu0
    %v124 = vmul.f32 %v118, 0.35355338
    %v125 = vpack.c.bf16 %v124, %v124
    %v126 = vpack.c.bf16 %v118, %v118
    %128 = vrot.lane.b32.xlu0 %v126, 96
    %v129 = vpop.permute.xlu0 %128
    %vm130 = vcmask 64512
    %v132 = vsel %vm130, %v125, 0
    %v135 = vsel %vm130, %v129, 0
    %137 = vmatprep.subr.bf16.mxu0 0
    %138 = vmatpush1.bf16.xpose.msra.mxu0 %v135
    %139 = vmatprep.subr.bf16.mxu0 0
    %140 = vmatpush1.bf16.xpose.msra.mxu0 0
    %141 = vmatprep.subr.bf16.mxu0 0
    %142 = vmatpush1.bf16.xpose.msra.mxu0 0
    %143 = vmatprep.subr.bf16.mxu0 0
    %144 = vmatpush1.bf16.xpose.msra.mxu0 0
    %145 = vmatprep.subr.bf16.mxu0 0
    %146 = vmatpush1.bf16.xpose.msra.mxu0 0
    %147 = vmatprep.subr.bf16.mxu0 0
    %148 = vmatpush1.bf16.xpose.msra.mxu0 0
    %149 = vmatprep.subr.bf16.mxu0 0
    %150 = vmatpush1.bf16.xpose.msra.mxu0 0
    %151 = vmatprep.subr.bf16.mxu0 0
    %152 = vmatpush1.bf16.xpose.msra.mxu0 0
    %153 = vmatprep.subr.bf16.mxu0 0
    %154 = vmatpush1.bf16.xpose.msra.mxu0 0
    %155 = vmatprep.subr.bf16.mxu0 0
    %156 = vmatpush1.bf16.xpose.msra.mxu0 0
    %157 = vmatprep.subr.bf16.mxu0 0
    %158 = vmatpush1.bf16.xpose.msra.mxu0 0
    %159 = vmatprep.subr.bf16.mxu0 0
    %160 = vmatpush1.bf16.xpose.msra.mxu0 0
    %161 = vmatprep.subr.bf16.mxu0 0
    %162 = vmatpush1.bf16.xpose.msra.mxu0 0
    %163 = vmatprep.subr.bf16.mxu0 0
    %164 = vmatpush1.bf16.xpose.msra.mxu0 0
    %165 = vmatprep.subr.bf16.mxu0 0
    %166 = vmatpush1.bf16.xpose.msra.mxu0 0
    %167 = vmatprep.subr.bf16.mxu0 0
    %168 = vmatpush1.bf16.xpose.msra.mxu0 0
    %169 = vmatprep.mubr.bf16.mxu0 0
    %170 = vmatmul.mubr.bf16.gmra.mrb[0].mxu0 %v132
    %v171 = vpop.f32.mrb[0].mxu0
    %v172 = vadd.f32 0.0, %v171
    %v173 = vpop.f32.mrb[0].mxu0
    %v174 = vpop.f32.mrb[0].mxu0
    %v175 = vpop.f32.mrb[0].mxu0
    %176 = vdwg.mxu0
    %v177 = vsel %vm130, %v172, -inf
    %178 = vmax.xlane.f32.xlu0 %v177
    %v179 = vpop.xlane.xlu0 %178
    %v180 = vsub.f32 %v172, %v179
    %v181 = vmul.f32 %v180, 1.442695
    %v182 = vpow.pop %v181
    %v183 = vsel %vm130, %v182, 0.0
    %184 = vadd.xlane.f32.xlu0 %v183
    %v185 = vpop.xlane.xlu0 %184
    %v186 = vrcp.pop %v185
    %v187 = vmul.f32 %v182, %v186
    %v188 = vpack.c.bf16 %v187, %v187
    %189 = vrot.lane.b32.xlu0 %v126, 64
    %v190 = vpop.permute.xlu0 %189
    %v192 = vsel %vm130, %v188, 0
    %vm194 = vcmask 1043456
    %v196 = vsel %vm194, %v190, 0
    %198 = vmatprep.subr.bf16.mxu0 0
    %199 = vmatpush1.bf16.msra.mxu0 %v196
    %200 = vmatprep.subr.bf16.mxu0 0
    %201 = vmatpush1.bf16.msra.mxu0 0
    %202 = vmatprep.subr.bf16.mxu0 0
    %203 = vmatpush1.bf16.msra.mxu0 0
    %204 = vmatprep.subr.bf16.mxu0 0
    %205 = vmatpush1.bf16.msra.mxu0 0
    %206 = vmatprep.subr.bf16.mxu0 0
    %207 = vmatpush1.bf16.msra.mxu0 0
    %208 = vmatprep.subr.bf16.mxu0 0
    %209 = vmatpush1.bf16.msra.mxu0 0
    %210 = vmatprep.subr.bf16.mxu0 0
    %211 = vmatpush1.bf16.msra.mxu0 0
    %212 = vmatprep.subr.bf16.mxu0 0
    %213 = vmatpush1.bf16.msra.mxu0 0
    %214 = vmatprep.subr.bf16.mxu0 0
    %215 = vmatpush1.bf16.msra.mxu0 0
    %216 = vmatprep.subr.bf16.mxu0 0
    %217 = vmatpush1.bf16.msra.mxu0 0
    %218 = vmatprep.subr.bf16.mxu0 0
    %219 = vmatpush1.bf16.msra.mxu0 0
    %220 = vmatprep.subr.bf16.mxu0 0
    %221 = vmatpush1.bf16.msra.mxu0 0
    %222 = vmatprep.subr.bf16.mxu0 0
    %223 = vmatpush1.bf16.msra.mxu0 0
    %224 = vmatprep.subr.bf16.mxu0 0
    %225 = vmatpush1.bf16.msra.mxu0 0
    %226 = vmatprep.subr.bf16.mxu0 0
    %227 = vmatpush1.bf16.msra.mxu0 0
    %228 = vmatprep.subr.bf16.mxu0 0
    %229 = vmatpush1.bf16.msra.mxu0 0
    %230 = vmatprep.mubr.bf16.mxu0 0
    %231 = vmatmul.mubr.bf16.gmra.mrb[0].mxu0 %v192
    %v232 = vpop.f32.mrb[0].mxu0
    %v233 = vadd.f32 0.0, %v232
    %v234 = vpop.f32.mrb[0].mxu0
    %v235 = vpop.f32.mrb[0].mxu0
    %v236 = vpop.f32.mrb[0].mxu0
    %237 = vdwg.mxu0
    %v238 = vpack.c.bf16 %v233, %v233
    %v239 = vld [vmem:[%s2] sm:$0xf]
    %241 = vrot.lane.b32.xlu0 %v125, 120
    %v242 = vpop.permute.xlu0 %241
    %243 = vrot.lane.b32.xlu0 %v126, 88
    %v244 = vpop.permute.xlu0 %243
    %v246 = vsel %vm130, %v242, 0
    %v249 = vsel %vm130, %v244, 0
    %251 = vmatprep.subr.bf16.mxu0 0
    %252 = vmatpush1.bf16.xpose.msra.mxu0 %v249
    %253 = vmatprep.subr.bf16.mxu0 0
    %254 = vmatpush1.bf16.xpose.msra.mxu0 0
    %255 = vmatprep.subr.bf16.mxu0 0
    %256 = vmatpush1.bf16.xpose.msra.mxu0 0
    %257 = vmatprep.subr.bf16.mxu0 0
    %258 = vmatpush1.bf16.xpose.msra.mxu0 0
    %259 = vmatprep.subr.bf16.mxu0 0
    %260 = vmatpush1.bf16.xpose.msra.mxu0 0
    %261 = vmatprep.subr.bf16.mxu0 0
    %262 = vmatpush1.bf16.xpose.msra.mxu0 0
    %263 = vmatprep.subr.bf16.mxu0 0
    %264 = vmatpush1.bf16.xpose.msra.mxu0 0
    %265 = vmatprep.subr.bf16.mxu0 0
    %266 = vmatpush1.bf16.xpose.msra.mxu0 0
    %267 = vmatprep.subr.bf16.mxu0 0
    %268 = vmatpush1.bf16.xpose.msra.mxu0 0
    %269 = vmatprep.subr.bf16.mxu0 0
    %270 = vmatpush1.bf16.xpose.msra.mxu0 0
    %271 = vmatprep.subr.bf16.mxu0 0
    %272 = vmatpush1.bf16.xpose.msra.mxu0 0
    %273 = vmatprep.subr.bf16.mxu0 0
    %274 = vmatpush1.bf16.xpose.msra.mxu0 0
    %275 = vmatprep.subr.bf16.mxu0 0
    %276 = vmatpush1.bf16.xpose.msra.mxu0 0
    %277 = vmatprep.subr.bf16.mxu0 0
    %278 = vmatpush1.bf16.xpose.msra.mxu0 0
    %279 = vmatprep.subr.bf16.mxu0 0
    %280 = vmatpush1.bf16.xpose.msra.mxu0 0
    %281 = vmatprep.subr.bf16.mxu0 0
    %282 = vmatpush1.bf16.xpose.msra.mxu0 0
    %283 = vmatprep.mubr.bf16.mxu0 0
    %284 = vmatmul.mubr.bf16.gmra.mrb[0].mxu0 %v246
    %v285 = vpop.f32.mrb[0].mxu0
    %v286 = vadd.f32 0.0, %v285
    %v287 = vpop.f32.mrb[0].mxu0
    %v288 = vpop.f32.mrb[0].mxu0
    %v289 = vpop.f32.mrb[0].mxu0
    %290 = vdwg.mxu0
    %v291 = vsel %vm130, %v286, -inf
    %292 = vmax.xlane.f32.xlu0 %v291
    %v293 = vpop.xlane.xlu0 %292
    %v294 = vsub.f32 %v286, %v293
    %v295 = vmul.f32 %v294, 1.442695
    %v296 = vpow.pop %v295
    %v297 = vsel %vm130, %v296, 0.0
    %298 = vadd.xlane.f32.xlu0 %v297
    %v299 = vpop.xlane.xlu0 %298
    %v300 = vrcp.pop %v299
    %v301 = vmul.f32 %v296, %v300
    %v302 = vpack.c.bf16 %v301, %v301
    %303 = vrot.lane.b32.xlu0 %v126, 56
    %v304 = vpop.permute.xlu0 %303
    %v306 = vsel %vm130, %v302, 0
    %v309 = vsel %vm194, %v304, 0
    %311 = vmatprep.subr.bf16.mxu0 0
    %312 = vmatpush1.bf16.msra.mxu0 %v309
    %313 = vmatprep.subr.bf16.mxu0 0
    %314 = vmatpush1.bf16.msra.mxu0 0
    %315 = vmatprep.subr.bf16.mxu0 0
    %316 = vmatpush1.bf16.msra.mxu0 0
    %317 = vmatprep.subr.bf16.mxu0 0
    %318 = vmatpush1.bf16.msra.mxu0 0
    %319 = vmatprep.subr.bf16.mxu0 0
    %320 = vmatpush1.bf16.msra.mxu0 0
    %321 = vmatprep.subr.bf16.mxu0 0
    %322 = vmatpush1.bf16.msra.mxu0 0
    %323 = vmatprep.subr.bf16.mxu0 0
    %324 = vmatpush1.bf16.msra.mxu0 0
    %325 = vmatprep.subr.bf16.mxu0 0
    %326 = vmatpush1.bf16.msra.mxu0 0
    %327 = vmatprep.subr.bf16.mxu0 0
    %328 = vmatpush1.bf16.msra.mxu0 0
    %329 = vmatprep.subr.bf16.mxu0 0
    %330 = vmatpush1.bf16.msra.mxu0 0
    %331 = vmatprep.subr.bf16.mxu0 0
    %332 = vmatpush1.bf16.msra.mxu0 0
    %333 = vmatprep.subr.bf16.mxu0 0
    %334 = vmatpush1.bf16.msra.mxu0 0
    %335 = vmatprep.subr.bf16.mxu0 0
    %336 = vmatpush1.bf16.msra.mxu0 0
    %337 = vmatprep.subr.bf16.mxu0 0
    %338 = vmatpush1.bf16.msra.mxu0 0
    %339 = vmatprep.subr.bf16.mxu0 0
    %340 = vmatpush1.bf16.msra.mxu0 0
    %341 = vmatprep.subr.bf16.mxu0 0
    %342 = vmatpush1.bf16.msra.mxu0 0
    %343 = vmatprep.mubr.bf16.mxu0 0
    %344 = vmatmul.mubr.bf16.gmra.mrb[0].mxu0 %v306
    %v345 = vpop.f32.mrb[0].mxu0
    %v346 = vadd.f32 0.0, %v345
    %v347 = vpop.f32.mrb[0].mxu0
    %v348 = vpop.f32.mrb[0].mxu0
    %v349 = vpop.f32.mrb[0].mxu0
    %350 = vdwg.mxu0
    %v351 = vpack.c.bf16 %v346, %v346
    %s352 = scalar_lea.vmem %s2, 4
    %v353 = vld [vmem:[%s352] sm:$0xf]
    %v355 = vsel %vm130, %v351, 0
    %v358 = vsel %vm194, %v353, 0
    %360 = vmatprep.subr.bf16.mxu0 0
    %361 = vmatpush1.bf16.msra.mxu0 %v358
    %362 = vmatprep.subr.bf16.mxu0 0
    %363 = vmatpush1.bf16.msra.mxu0 0
    %364 = vmatprep.subr.bf16.mxu0 0
    %365 = vmatpush1.bf16.msra.mxu0 0
    %366 = vmatprep.subr.bf16.mxu0 0
    %367 = vmatpush1.bf16.msra.mxu0 0
    %368 = vmatprep.subr.bf16.mxu0 0
    %369 = vmatpush1.bf16.msra.mxu0 0
    %370 = vmatprep.subr.bf16.mxu0 0
    %371 = vmatpush1.bf16.msra.mxu0 0
    %372 = vmatprep.subr.bf16.mxu0 0
    %373 = vmatpush1.bf16.msra.mxu0 0
    %374 = vmatprep.subr.bf16.mxu0 0
    %375 = vmatpush1.bf16.msra.mxu0 0
    %376 = vmatprep.subr.bf16.mxu0 0
    %377 = vmatpush1.bf16.msra.mxu0 0
    %378 = vmatprep.subr.bf16.mxu0 0
    %379 = vmatpush1.bf16.msra.mxu0 0
    %380 = vmatprep.subr.bf16.mxu0 0
    %381 = vmatpush1.bf16.msra.mxu0 0
    %382 = vmatprep.subr.bf16.mxu0 0
    %383 = vmatpush1.bf16.msra.mxu0 0
    %384 = vmatprep.subr.bf16.mxu0 0
    %385 = vmatpush1.bf16.msra.mxu0 0
    %386 = vmatprep.subr.bf16.mxu0 0
    %387 = vmatpush1.bf16.msra.mxu0 0
    %388 = vmatprep.subr.bf16.mxu0 0
    %389 = vmatpush1.bf16.msra.mxu0 0
    %390 = vmatprep.subr.bf16.mxu0 0
    %391 = vmatpush1.bf16.msra.mxu0 0
    %392 = vmatprep.mubr.bf16.mxu0 0
    %393 = vmatmul.mubr.bf16.gmra.mrb[0].mxu0 %v355
    %v394 = vpop.f32.mrb[0].mxu0
    %v395 = vadd.f32 0.0, %v394
    %v396 = vpop.f32.mrb[0].mxu0
    %v397 = vpop.f32.mrb[0].mxu0
    %v398 = vpop.f32.mrb[0].mxu0
    %399 = vdwg.mxu0
    %v401 = vsel %vm130, %v238, 0
    %v404 = vsel %vm194, %v239, 0
    %406 = vmatprep.subr.bf16.mxu0 0
    %407 = vmatpush1.bf16.msra.mxu0 %v404
    %408 = vmatprep.subr.bf16.mxu0 0
    %409 = vmatpush1.bf16.msra.mxu0 0
    %410 = vmatprep.subr.bf16.mxu0 0
    %411 = vmatpush1.bf16.msra.mxu0 0
    %412 = vmatprep.subr.bf16.mxu0 0
    %413 = vmatpush1.bf16.msra.mxu0 0
    %414 = vmatprep.subr.bf16.mxu0 0
    %415 = vmatpush1.bf16.msra.mxu0 0
    %416 = vmatprep.subr.bf16.mxu0 0
    %417 = vmatpush1.bf16.msra.mxu0 0
    %418 = vmatprep.subr.bf16.mxu0 0
    %419 = vmatpush1.bf16.msra.mxu0 0
    %420 = vmatprep.subr.bf16.mxu0 0
    %421 = vmatpush1.bf16.msra.mxu0 0
    %422 = vmatprep.subr.bf16.mxu0 0
    %423 = vmatpush1.bf16.msra.mxu0 0
    %424 = vmatprep.subr.bf16.mxu0 0
    %425 = vmatpush1.bf16.msra.mxu0 0
    %426 = vmatprep.subr.bf16.mxu0 0
    %427 = vmatpush1.bf16.msra.mxu0 0
    %428 = vmatprep.subr.bf16.mxu0 0
    %429 = vmatpush1.bf16.msra.mxu0 0
    %430 = vmatprep.subr.bf16.mxu0 0
    %431 = vmatpush1.bf16.msra.mxu0 0
    %432 = vmatprep.subr.bf16.mxu0 0
    %433 = vmatpush1.bf16.msra.mxu0 0
    %434 = vmatprep.subr.bf16.mxu0 0
    %435 = vmatpush1.bf16.msra.mxu0 0
    %436 = vmatprep.subr.bf16.mxu0 0
    %437 = vmatpush1.bf16.msra.mxu0 0
    %438 = vmatprep.mubr.bf16.mxu0 0
    %439 = vmatmul.mubr.bf16.gmra.mrb[0].mxu0 %v401
    %v440 = vpop.f32.mrb[0].mxu0
    %v441 = vadd.f32 %v395, %v440
    %v442 = vpop.f32.mrb[0].mxu0
    %v443 = vpop.f32.mrb[0].mxu0
    %v444 = vpop.f32.mrb[0].mxu0
    %445 = vdwg.mxu0
    %446 = vrot.lane.b32.xlu0 %v125, 112
    %v447 = vpop.permute.xlu0 %446
    %448 = vrot.lane.b32.xlu0 %v126, 80
    %v449 = vpop.permute.xlu0 %448
    %v451 = vsel %vm130, %v447, 0
    %v454 = vsel %vm130, %v449, 0
    %456 = vmatprep.subr.bf16.mxu0 0
    %457 = vmatpush1.bf16.xpose.msra.mxu0 %v454
    %458 = vmatprep.subr.bf16.mxu0 0
    %459 = vmatpush1.bf16.xpose.msra.mxu0 0
    %460 = vmatprep.subr.bf16.mxu0 0
    %461 = vmatpush1.bf16.xpose.msra.mxu0 0
    %462 = vmatprep.subr.bf16.mxu0 0
    %463 = vmatpush1.bf16.xpose.msra.mxu0 0
    %464 = vmatprep.subr.bf16.mxu0 0
    %465 = vmatpush1.bf16.xpose.msra.mxu0 0
    %466 = vmatprep.subr.bf16.mxu0 0
    %467 = vmatpush1.bf16.xpose.msra.mxu0 0
    %468 = vmatprep.subr.bf16.mxu0 0
    %469 = vmatpush1.bf16.xpose.msra.mxu0 0
    %470 = vmatprep.subr.bf16.mxu0 0
    %471 = vmatpush1.bf16.xpose.msra.mxu0 0
    %472 = vmatprep.subr.bf16.mxu0 0
    %473 = vmatpush1.bf16.xpose.msra.mxu0 0
    %474 = vmatprep.subr.bf16.mxu0 0
    %475 = vmatpush1.bf16.xpose.msra.mxu0 0
    %476 = vmatprep.subr.bf16.mxu0 0
    %477 = vmatpush1.bf16.xpose.msra.mxu0 0
    %478 = vmatprep.subr.bf16.mxu0 0
    %479 = vmatpush1.bf16.xpose.msra.mxu0 0
    %480 = vmatprep.subr.bf16.mxu0 0
    %481 = vmatpush1.bf16.xpose.msra.mxu0 0
    %482 = vmatprep.subr.bf16.mxu0 0
    %483 = vmatpush1.bf16.xpose.msra.mxu0 0
    %484 = vmatprep.subr.bf16.mxu0 0
    %485 = vmatpush1.bf16.xpose.msra.mxu0 0
    %486 = vmatprep.subr.bf16.mxu0 0
    %487 = vmatpush1.bf16.xpose.msra.mxu0 0
    %488 = vmatprep.mubr.bf16.mxu0 0
    %489 = vmatmul.mubr.bf16.gmra.mrb[0].mxu0 %v451
    %v490 = vpop.f32.mrb[0].mxu0
    %v491 = vadd.f32 0.0, %v490
    %v492 = vpop.f32.mrb[0].mxu0
    %v493 = vpop.f32.mrb[0].mxu0
    %v494 = vpop.f32.mrb[0].mxu0
    %495 = vdwg.mxu0
    %v496 = vsel %vm130, %v491, -inf
    %497 = vmax.xlane.f32.xlu0 %v496
    %v498 = vpop.xlane.xlu0 %497
    %v499 = vsub.f32 %v491, %v498
    %v500 = vmul.f32 %v499, 1.442695
    %v501 = vpow.pop %v500
    %v502 = vsel %vm130, %v501, 0.0
    %503 = vadd.xlane.f32.xlu0 %v502
    %v504 = vpop.xlane.xlu0 %503
    %v505 = vrcp.pop %v504
    %v506 = vmul.f32 %v501, %v505
    %v507 = vpack.c.bf16 %v506, %v506
    %508 = vrot.lane.b32.xlu0 %v126, 48
    %v509 = vpop.permute.xlu0 %508
    %v511 = vsel %vm130, %v507, 0
    %v514 = vsel %vm194, %v509, 0
    %516 = vmatprep.subr.bf16.mxu0 0
    %517 = vmatpush1.bf16.msra.mxu0 %v514
    %518 = vmatprep.subr.bf16.mxu0 0
    %519 = vmatpush1.bf16.msra.mxu0 0
    %520 = vmatprep.subr.bf16.mxu0 0
    %521 = vmatpush1.bf16.msra.mxu0 0
    %522 = vmatprep.subr.bf16.mxu0 0
    %523 = vmatpush1.bf16.msra.mxu0 0
    %524 = vmatprep.subr.bf16.mxu0 0
    %525 = vmatpush1.bf16.msra.mxu0 0
    %526 = vmatprep.subr.bf16.mxu0 0
    %527 = vmatpush1.bf16.msra.mxu0 0
    %528 = vmatprep.subr.bf16.mxu0 0
    %529 = vmatpush1.bf16.msra.mxu0 0
    %530 = vmatprep.subr.bf16.mxu0 0
    %531 = vmatpush1.bf16.msra.mxu0 0
    %532 = vmatprep.subr.bf16.mxu0 0
    %533 = vmatpush1.bf16.msra.mxu0 0
    %534 = vmatprep.subr.bf16.mxu0 0
    %535 = vmatpush1.bf16.msra.mxu0 0
    %536 = vmatprep.subr.bf16.mxu0 0
    %537 = vmatpush1.bf16.msra.mxu0 0
    %538 = vmatprep.subr.bf16.mxu0 0
    %539 = vmatpush1.bf16.msra.mxu0 0
    %540 = vmatprep.subr.bf16.mxu0 0
    %541 = vmatpush1.bf16.msra.mxu0 0
    %542 = vmatprep.subr.bf16.mxu0 0
    %543 = vmatpush1.bf16.msra.mxu0 0
    %544 = vmatprep.subr.bf16.mxu0 0
    %545 = vmatpush1.bf16.msra.mxu0 0
    %546 = vmatprep.subr.bf16.mxu0 0
    %547 = vmatpush1.bf16.msra.mxu0 0
    %548 = vmatprep.mubr.bf16.mxu0 0
    %549 = vmatmul.mubr.bf16.gmra.mrb[0].mxu0 %v511
    %v550 = vpop.f32.mrb[0].mxu0
    %v551 = vadd.f32 0.0, %v550
    %v552 = vpop.f32.mrb[0].mxu0
    %v553 = vpop.f32.mrb[0].mxu0
    %v554 = vpop.f32.mrb[0].mxu0
    %555 = vdwg.mxu0
    %v556 = vpack.c.bf16 %v551, %v551
    %s557 = scalar_lea.vmem %s2, 8
    %v558 = vld [vmem:[%s557] sm:$0xf]
    %v560 = vsel %vm130, %v556, 0
    %v563 = vsel %vm194, %v558, 0
    %565 = vmatprep.subr.bf16.mxu0 0
    %566 = vmatpush1.bf16.msra.mxu0 %v563
    %567 = vmatprep.subr.bf16.mxu0 0
    %568 = vmatpush1.bf16.msra.mxu0 0
    %569 = vmatprep.subr.bf16.mxu0 0
    %570 = vmatpush1.bf16.msra.mxu0 0
    %571 = vmatprep.subr.bf16.mxu0 0
    %572 = vmatpush1.bf16.msra.mxu0 0
    %573 = vmatprep.subr.bf16.mxu0 0
    %574 = vmatpush1.bf16.msra.mxu0 0
    %575 = vmatprep.subr.bf16.mxu0 0
    %576 = vmatpush1.bf16.msra.mxu0 0
    %577 = vmatprep.subr.bf16.mxu0 0
    %578 = vmatpush1.bf16.msra.mxu0 0
    %579 = vmatprep.subr.bf16.mxu0 0
    %580 = vmatpush1.bf16.msra.mxu0 0
    %581 = vmatprep.subr.bf16.mxu0 0
    %582 = vmatpush1.bf16.msra.mxu0 0
    %583 = vmatprep.subr.bf16.mxu0 0
    %584 = vmatpush1.bf16.msra.mxu0 0
    %585 = vmatprep.subr.bf16.mxu0 0
    %586 = vmatpush1.bf16.msra.mxu0 0
    %587 = vmatprep.subr.bf16.mxu0 0
    %588 = vmatpush1.bf16.msra.mxu0 0
    %589 = vmatprep.subr.bf16.mxu0 0
    %590 = vmatpush1.bf16.msra.mxu0 0
    %591 = vmatprep.subr.bf16.mxu0 0
    %592 = vmatpush1.bf16.msra.mxu0 0
    %593 = vmatprep.subr.bf16.mxu0 0
    %594 = vmatpush1.bf16.msra.mxu0 0
    %595 = vmatprep.subr.bf16.mxu0 0
    %596 = vmatpush1.bf16.msra.mxu0 0
    %597 = vmatprep.mubr.bf16.mxu0 0
    %598 = vmatmul.mubr.bf16.gmra.mrb[0].mxu0 %v560
    %v599 = vpop.f32.mrb[0].mxu0
    %v600 = vadd.f32 0.0, %v599
    %v601 = vpop.f32.mrb[0].mxu0
    %v602 = vpop.f32.mrb[0].mxu0
    %v603 = vpop.f32.mrb[0].mxu0
    %604 = vdwg.mxu0
    %v605 = vadd.f32 %v441, %v600
    %606 = vrot.lane.b32.xlu0 %v125, 104
    %v607 = vpop.permute.xlu0 %606
    %608 = vrot.lane.b32.xlu0 %v126, 72
    %v609 = vpop.permute.xlu0 %608
    %v611 = vsel %vm130, %v607, 0
    %v614 = vsel %vm130, %v609, 0
    %616 = vmatprep.subr.bf16.mxu0 0
    %617 = vmatpush1.bf16.xpose.msra.mxu0 %v614
    %618 = vmatprep.subr.bf16.mxu0 0
    %619 = vmatpush1.bf16.xpose.msra.mxu0 0
    %620 = vmatprep.subr.bf16.mxu0 0
    %621 = vmatpush1.bf16.xpose.msra.mxu0 0
    %622 = vmatprep.subr.bf16.mxu0 0
    %623 = vmatpush1.bf16.xpose.msra.mxu0 0
    %624 = vmatprep.subr.bf16.mxu0 0
    %625 = vmatpush1.bf16.xpose.msra.mxu0 0
    %626 = vmatprep.subr.bf16.mxu0 0
    %627 = vmatpush1.bf16.xpose.msra.mxu0 0
    %628 = vmatprep.subr.bf16.mxu0 0
    %629 = vmatpush1.bf16.xpose.msra.mxu0 0
    %630 = vmatprep.subr.bf16.mxu0 0
    %631 = vmatpush1.bf16.xpose.msra.mxu0 0
    %632 = vmatprep.subr.bf16.mxu0 0
    %633 = vmatpush1.bf16.xpose.msra.mxu0 0
    %634 = vmatprep.subr.bf16.mxu0 0
    %635 = vmatpush1.bf16.xpose.msra.mxu0 0
    %636 = vmatprep.subr.bf16.mxu0 0
    %637 = vmatpush1.bf16.xpose.msra.mxu0 0
    %638 = vmatprep.subr.bf16.mxu0 0
    %639 = vmatpush1.bf16.xpose.msra.mxu0 0
    %640 = vmatprep.subr.bf16.mxu0 0
    %641 = vmatpush1.bf16.xpose.msra.mxu0 0
    %642 = vmatprep.subr.bf16.mxu0 0
    %643 = vmatpush1.bf16.xpose.msra.mxu0 0
    %644 = vmatprep.subr.bf16.mxu0 0
    %645 = vmatpush1.bf16.xpose.msra.mxu0 0
    %646 = vmatprep.subr.bf16.mxu0 0
    %647 = vmatpush1.bf16.xpose.msra.mxu0 0
    %648 = vmatprep.mubr.bf16.mxu0 0
    %649 = vmatmul.mubr.bf16.gmra.mrb[0].mxu0 %v611
    %v650 = vpop.f32.mrb[0].mxu0
    %v651 = vadd.f32 0.0, %v650
    %v652 = vpop.f32.mrb[0].mxu0
    %v653 = vpop.f32.mrb[0].mxu0
    %v654 = vpop.f32.mrb[0].mxu0
    %655 = vdwg.mxu0
    %v656 = vsel %vm130, %v651, -inf
    %657 = vmax.xlane.f32.xlu0 %v656
    %v658 = vpop.xlane.xlu0 %657
    %v659 = vsub.f32 %v651, %v658
    %v660 = vmul.f32 %v659, 1.442695
    %v661 = vpow.pop %v660
    %v662 = vsel %vm130, %v661, 0.0
    %663 = vadd.xlane.f32.xlu0 %v662
    %v664 = vpop.xlane.xlu0 %663
    %v665 = vrcp.pop %v664
    %v666 = vmul.f32 %v661, %v665
    %v667 = vpack.c.bf16 %v666, %v666
    %668 = vrot.lane.b32.xlu0 %v126, 40
    %v669 = vpop.permute.xlu0 %668
    %v671 = vsel %vm130, %v667, 0
    %v674 = vsel %vm194, %v669, 0
    %676 = vmatprep.subr.bf16.mxu0 0
    %677 = vmatpush1.bf16.msra.mxu0 %v674
    %678 = vmatprep.subr.bf16.mxu0 0
    %679 = vmatpush1.bf16.msra.mxu0 0
    %680 = vmatprep.subr.bf16.mxu0 0
    %681 = vmatpush1.bf16.msra.mxu0 0
    %682 = vmatprep.subr.bf16.mxu0 0
    %683 = vmatpush1.bf16.msra.mxu0 0
    %684 = vmatprep.subr.bf16.mxu0 0
    %685 = vmatpush1.bf16.msra.mxu0 0
    %686 = vmatprep.subr.bf16.mxu0 0
    %687 = vmatpush1.bf16.msra.mxu0 0
    %688 = vmatprep.subr.bf16.mxu0 0
    %689 = vmatpush1.bf16.msra.mxu0 0
    %690 = vmatprep.subr.bf16.mxu0 0
    %691 = vmatpush1.bf16.msra.mxu0 0
    %692 = vmatprep.subr.bf16.mxu0 0
    %693 = vmatpush1.bf16.msra.mxu0 0
    %694 = vmatprep.subr.bf16.mxu0 0
    %695 = vmatpush1.bf16.msra.mxu0 0
    %696 = vmatprep.subr.bf16.mxu0 0
    %697 = vmatpush1.bf16.msra.mxu0 0
    %698 = vmatprep.subr.bf16.mxu0 0
    %699 = vmatpush1.bf16.msra.mxu0 0
    %700 = vmatprep.subr.bf16.mxu0 0
    %701 = vmatpush1.bf16.msra.mxu0 0
    %702 = vmatprep.subr.bf16.mxu0 0
    %703 = vmatpush1.bf16.msra.mxu0 0
    %704 = vmatprep.subr.bf16.mxu0 0
    %705 = vmatpush1.bf16.msra.mxu0 0
    %706 = vmatprep.subr.bf16.mxu0 0
    %707 = vmatpush1.bf16.msra.mxu0 0
    %708 = vmatprep.mubr.bf16.mxu0 0
    %709 = vmatmul.mubr.bf16.gmra.mrb[0].mxu0 %v671
    %v710 = vpop.f32.mrb[0].mxu0
    %v711 = vadd.f32 0.0, %v710
    %v712 = vpop.f32.mrb[0].mxu0
    %v713 = vpop.f32.mrb[0].mxu0
    %v714 = vpop.f32.mrb[0].mxu0
    %715 = vdwg.mxu0
    %v716 = vpack.c.bf16 %v711, %v711
    %s717 = scalar_lea.vmem %s2, 12
    %v718 = vld [vmem:[%s717] sm:$0xf]
    %v720 = vsel %vm130, %v716, 0
    %v723 = vsel %vm194, %v718, 0
    %725 = vmatprep.subr.bf16.mxu0 0
    %726 = vmatpush1.bf16.msra.mxu0 %v723
    %727 = vmatprep.subr.bf16.mxu0 0
    %728 = vmatpush1.bf16.msra.mxu0 0
    %729 = vmatprep.subr.bf16.mxu0 0
    %730 = vmatpush1.bf16.msra.mxu0 0
    %731 = vmatprep.subr.bf16.mxu0 0
    %732 = vmatpush1.bf16.msra.mxu0 0
    %733 = vmatprep.subr.bf16.mxu0 0
    %734 = vmatpush1.bf16.msra.mxu0 0
    %735 = vmatprep.subr.bf16.mxu0 0
    %736 = vmatpush1.bf16.msra.mxu0 0
    %737 = vmatprep.subr.bf16.mxu0 0
    %738 = vmatpush1.bf16.msra.mxu0 0
    %739 = vmatprep.subr.bf16.mxu0 0
    %740 = vmatpush1.bf16.msra.mxu0 0
    %741 = vmatprep.subr.bf16.mxu0 0
    %742 = vmatpush1.bf16.msra.mxu0 0
    %743 = vmatprep.subr.bf16.mxu0 0
    %744 = vmatpush1.bf16.msra.mxu0 0
    %745 = vmatprep.subr.bf16.mxu0 0
    %746 = vmatpush1.bf16.msra.mxu0 0
    %747 = vmatprep.subr.bf16.mxu0 0
    %748 = vmatpush1.bf16.msra.mxu0 0
    %749 = vmatprep.subr.bf16.mxu0 0
    %750 = vmatpush1.bf16.msra.mxu0 0
    %751 = vmatprep.subr.bf16.mxu0 0
    %752 = vmatpush1.bf16.msra.mxu0 0
    %753 = vmatprep.subr.bf16.mxu0 0
    %754 = vmatpush1.bf16.msra.mxu0 0
    %755 = vmatprep.subr.bf16.mxu0 0
    %756 = vmatpush1.bf16.msra.mxu0 0
    %757 = vmatprep.mubr.bf16.mxu0 0
    %758 = vmatmul.mubr.bf16.gmra.mrb[0].mxu0 %v720
    %v759 = vpop.f32.mrb[0].mxu0
    %v760 = vadd.f32 0.0, %v759
    %v761 = vpop.f32.mrb[0].mxu0
    %v762 = vpop.f32.mrb[0].mxu0
    %v763 = vpop.f32.mrb[0].mxu0
    %764 = vdwg.mxu0
    %v765 = vadd.f32 %v605, %v760
    %v766 = vmul.f32 %v121, 0.35355338
    %v767 = vpack.c.bf16 %v766, %v766
    %v768 = vpack.c.bf16 %v121, %v121
    %770 = vrot.lane.b32.xlu0 %v768, 96
    %v771 = vpop.permute.xlu0 %770
    %v773 = vsel %vm130, %v767, 0
    %v776 = vsel %vm130, %v771, 0
    %778 = vmatprep.subr.bf16.mxu0 0
    %779 = vmatpush1.bf16.xpose.msra.mxu0 %v776
    %780 = vmatprep.subr.bf16.mxu0 0
    %781 = vmatpush1.bf16.xpose.msra.mxu0 0
    %782 = vmatprep.subr.bf16.mxu0 0
    %783 = vmatpush1.bf16.xpose.msra.mxu0 0
    %784 = vmatprep.subr.bf16.mxu0 0
    %785 = vmatpush1.bf16.xpose.msra.mxu0 0
    %786 = vmatprep.subr.bf16.mxu0 0
    %787 = vmatpush1.bf16.xpose.msra.mxu0 0
    %788 = vmatprep.subr.bf16.mxu0 0
    %789 = vmatpush1.bf16.xpose.msra.mxu0 0
    %790 = vmatprep.subr.bf16.mxu0 0
    %791 = vmatpush1.bf16.xpose.msra.mxu0 0
    %792 = vmatprep.subr.bf16.mxu0 0
    %793 = vmatpush1.bf16.xpose.msra.mxu0 0
    %794 = vmatprep.subr.bf16.mxu0 0
    %795 = vmatpush1.bf16.xpose.msra.mxu0 0
    %796 = vmatprep.subr.bf16.mxu0 0
    %797 = vmatpush1.bf16.xpose.msra.mxu0 0
    %798 = vmatprep.subr.bf16.mxu0 0
    %799 = vmatpush1.bf16.xpose.msra.mxu0 0
    %800 = vmatprep.subr.bf16.mxu0 0
    %801 = vmatpush1.bf16.xpose.msra.mxu0 0
    %802 = vmatprep.subr.bf16.mxu0 0
    %803 = vmatpush1.bf16.xpose.msra.mxu0 0
    %804 = vmatprep.subr.bf16.mxu0 0
    %805 = vmatpush1.bf16.xpose.msra.mxu0 0
    %806 = vmatprep.subr.bf16.mxu0 0
    %807 = vmatpush1.bf16.xpose.msra.mxu0 0
    %808 = vmatprep.subr.bf16.mxu0 0
    %809 = vmatpush1.bf16.xpose.msra.mxu0 0
    %810 = vmatprep.mubr.bf16.mxu0 0
    %811 = vmatmul.mubr.bf16.gmra.mrb[0].mxu0 %v773
    %v812 = vpop.f32.mrb[0].mxu0
    %v813 = vadd.f32 0.0, %v812
    %v814 = vpop.f32.mrb[0].mxu0
    %v815 = vpop.f32.mrb[0].mxu0
    %v816 = vpop.f32.mrb[0].mxu0
    %817 = vdwg.mxu0
    %v818 = vsel %vm130, %v813, -inf
    %819 = vmax.xlane.f32.xlu0 %v818
    %v820 = vpop.xlane.xlu0 %819
    %v821 = vsub.f32 %v813, %v820
    %v822 = vmul.f32 %v821, 1.442695
    %v823 = vpow.pop %v822
    %v824 = vsel %vm130, %v823, 0.0
    %825 = vadd.xlane.f32.xlu0 %v824
    %v826 = vpop.xlane.xlu0 %825
    %v827 = vrcp.pop %v826
    %v828 = vmul.f32 %v823, %v827
    %v829 = vpack.c.bf16 %v828, %v828
    %830 = vrot.lane.b32.xlu0 %v768, 64
    %v831 = vpop.permute.xlu0 %830
    %v833 = vsel %vm130, %v829, 0
    %v836 = vsel %vm194, %v831, 0
    %838 = vmatprep.subr.bf16.mxu0 0
    %839 = vmatpush1.bf16.msra.mxu0 %v836
    %840 = vmatprep.subr.bf16.mxu0 0
    %841 = vmatpush1.bf16.msra.mxu0 0
    %842 = vmatprep.subr.bf16.mxu0 0
    %843 = vmatpush1.bf16.msra.mxu0 0
    %844 = vmatprep.subr.bf16.mxu0 0
    %845 = vmatpush1.bf16.msra.mxu0 0
    %846 = vmatprep.subr.bf16.mxu0 0
    %847 = vmatpush1.bf16.msra.mxu0 0
    %848 = vmatprep.subr.bf16.mxu0 0
    %849 = vmatpush1.bf16.msra.mxu0 0
    %850 = vmatprep.subr.bf16.mxu0 0
    %851 = vmatpush1.bf16.msra.mxu0 0
    %852 = vmatprep.subr.bf16.mxu0 0
    %853 = vmatpush1.bf16.msra.mxu0 0
    %854 = vmatprep.subr.bf16.mxu0 0
    %855 = vmatpush1.bf16.msra.mxu0 0
    %856 = vmatprep.subr.bf16.mxu0 0
    %857 = vmatpush1.bf16.msra.mxu0 0
    %858 = vmatprep.subr.bf16.mxu0 0
    %859 = vmatpush1.bf16.msra.mxu0 0
    %860 = vmatprep.subr.bf16.mxu0 0
    %861 = vmatpush1.bf16.msra.mxu0 0
    %862 = vmatprep.subr.bf16.mxu0 0
    %863 = vmatpush1.bf16.msra.mxu0 0
    %864 = vmatprep.subr.bf16.mxu0 0
    %865 = vmatpush1.bf16.msra.mxu0 0
    %866 = vmatprep.subr.bf16.mxu0 0
    %867 = vmatpush1.bf16.msra.mxu0 0
    %868 = vmatprep.subr.bf16.mxu0 0
    %869 = vmatpush1.bf16.msra.mxu0 0
    %870 = vmatprep.mubr.bf16.mxu0 0
    %871 = vmatmul.mubr.bf16.gmra.mrb[0].mxu0 %v833
    %v872 = vpop.f32.mrb[0].mxu0
    %v873 = vadd.f32 0.0, %v872
    %v874 = vpop.f32.mrb[0].mxu0
    %v875 = vpop.f32.mrb[0].mxu0
    %v876 = vpop.f32.mrb[0].mxu0
    %877 = vdwg.mxu0
    %v878 = vpack.c.bf16 %v873, %v873
    %880 = vrot.lane.b32.xlu0 %v767, 120
    %v881 = vpop.permute.xlu0 %880
    %882 = vrot.lane.b32.xlu0 %v768, 88
    %v883 = vpop.permute.xlu0 %882
    %v885 = vsel %vm130, %v881, 0
    %v888 = vsel %vm130, %v883, 0
    %890 = vmatprep.subr.bf16.mxu0 0
    %891 = vmatpush1.bf16.xpose.msra.mxu0 %v888
    %892 = vmatprep.subr.bf16.mxu0 0
    %893 = vmatpush1.bf16.xpose.msra.mxu0 0
    %894 = vmatprep.subr.bf16.mxu0 0
    %895 = vmatpush1.bf16.xpose.msra.mxu0 0
    %896 = vmatprep.subr.bf16.mxu0 0
    %897 = vmatpush1.bf16.xpose.msra.mxu0 0
    %898 = vmatprep.subr.bf16.mxu0 0
    %899 = vmatpush1.bf16.xpose.msra.mxu0 0
    %900 = vmatprep.subr.bf16.mxu0 0
    %901 = vmatpush1.bf16.xpose.msra.mxu0 0
    %902 = vmatprep.subr.bf16.mxu0 0
    %903 = vmatpush1.bf16.xpose.msra.mxu0 0
    %904 = vmatprep.subr.bf16.mxu0 0
    %905 = vmatpush1.bf16.xpose.msra.mxu0 0
    %906 = vmatprep.subr.bf16.mxu0 0
    %907 = vmatpush1.bf16.xpose.msra.mxu0 0
    %908 = vmatprep.subr.bf16.mxu0 0
    %909 = vmatpush1.bf16.xpose.msra.mxu0 0
    %910 = vmatprep.subr.bf16.mxu0 0
    %911 = vmatpush1.bf16.xpose.msra.mxu0 0
    %912 = vmatprep.subr.bf16.mxu0 0
    %913 = vmatpush1.bf16.xpose.msra.mxu0 0
    %914 = vmatprep.subr.bf16.mxu0 0
    %915 = vmatpush1.bf16.xpose.msra.mxu0 0
    %916 = vmatprep.subr.bf16.mxu0 0
    %917 = vmatpush1.bf16.xpose.msra.mxu0 0
    %918 = vmatprep.subr.bf16.mxu0 0
    %919 = vmatpush1.bf16.xpose.msra.mxu0 0
    %920 = vmatprep.subr.bf16.mxu0 0
    %921 = vmatpush1.bf16.xpose.msra.mxu0 0
    %922 = vmatprep.mubr.bf16.mxu0 0
    %923 = vmatmul.mubr.bf16.gmra.mrb[0].mxu0 %v885
    %v924 = vpop.f32.mrb[0].mxu0
    %v925 = vadd.f32 0.0, %v924
    %v926 = vpop.f32.mrb[0].mxu0
    %v927 = vpop.f32.mrb[0].mxu0
    %v928 = vpop.f32.mrb[0].mxu0
    %929 = vdwg.mxu0
    %v930 = vsel %vm130, %v925, -inf
    %931 = vmax.xlane.f32.xlu0 %v930
    %v932 = vpop.xlane.xlu0 %931
    %v933 = vsub.f32 %v925, %v932
    %v934 = vmul.f32 %v933, 1.442695
    %v935 = vpow.pop %v934
    %v936 = vsel %vm130, %v935, 0.0
    %937 = vadd.xlane.f32.xlu0 %v936
    %v938 = vpop.xlane.xlu0 %937
    %v939 = vrcp.pop %v938
    %v940 = vmul.f32 %v935, %v939
    %v941 = vpack.c.bf16 %v940, %v940
    %942 = vrot.lane.b32.xlu0 %v768, 56
    %v943 = vpop.permute.xlu0 %942
    %v945 = vsel %vm130, %v941, 0
    %v948 = vsel %vm194, %v943, 0
    %950 = vmatprep.subr.bf16.mxu0 0
    %951 = vmatpush1.bf16.msra.mxu0 %v948
    %952 = vmatprep.subr.bf16.mxu0 0
    %953 = vmatpush1.bf16.msra.mxu0 0
    %954 = vmatprep.subr.bf16.mxu0 0
    %955 = vmatpush1.bf16.msra.mxu0 0
    %956 = vmatprep.subr.bf16.mxu0 0
    %957 = vmatpush1.bf16.msra.mxu0 0
    %958 = vmatprep.subr.bf16.mxu0 0
    %959 = vmatpush1.bf16.msra.mxu0 0
    %960 = vmatprep.subr.bf16.mxu0 0
    %961 = vmatpush1.bf16.msra.mxu0 0
    %962 = vmatprep.subr.bf16.mxu0 0
    %963 = vmatpush1.bf16.msra.mxu0 0
    %964 = vmatprep.subr.bf16.mxu0 0
    %965 = vmatpush1.bf16.msra.mxu0 0
    %966 = vmatprep.subr.bf16.mxu0 0
    %967 = vmatpush1.bf16.msra.mxu0 0
    %968 = vmatprep.subr.bf16.mxu0 0
    %969 = vmatpush1.bf16.msra.mxu0 0
    %970 = vmatprep.subr.bf16.mxu0 0
    %971 = vmatpush1.bf16.msra.mxu0 0
    %972 = vmatprep.subr.bf16.mxu0 0
    %973 = vmatpush1.bf16.msra.mxu0 0
    %974 = vmatprep.subr.bf16.mxu0 0
    %975 = vmatpush1.bf16.msra.mxu0 0
    %976 = vmatprep.subr.bf16.mxu0 0
    %977 = vmatpush1.bf16.msra.mxu0 0
    %978 = vmatprep.subr.bf16.mxu0 0
    %979 = vmatpush1.bf16.msra.mxu0 0
    %980 = vmatprep.subr.bf16.mxu0 0
    %981 = vmatpush1.bf16.msra.mxu0 0
    %982 = vmatprep.mubr.bf16.mxu0 0
    %983 = vmatmul.mubr.bf16.gmra.mrb[0].mxu0 %v945
    %v984 = vpop.f32.mrb[0].mxu0
    %v985 = vadd.f32 0.0, %v984
    %v986 = vpop.f32.mrb[0].mxu0
    %v987 = vpop.f32.mrb[0].mxu0
    %v988 = vpop.f32.mrb[0].mxu0
    %989 = vdwg.mxu0
    %v990 = vpack.c.bf16 %v985, %v985
    %v992 = vsel %vm130, %v990, 0
    %994 = vmatprep.subr.bf16.mxu0 0
    %995 = vmatpush1.bf16.msra.mxu0 %v358
    %996 = vmatprep.subr.bf16.mxu0 0
    %997 = vmatpush1.bf16.msra.mxu0 0
    %998 = vmatprep.subr.bf16.mxu0 0
    %999 = vmatpush1.bf16.msra.mxu0 0
    %1000 = vmatprep.subr.bf16.mxu0 0
    %1001 = vmatpush1.bf16.msra.mxu0 0
    %1002 = vmatprep.subr.bf16.mxu0 0
    %1003 = vmatpush1.bf16.msra.mxu0 0
    %1004 = vmatprep.subr.bf16.mxu0 0
    %1005 = vmatpush1.bf16.msra.mxu0 0
    %1006 = vmatprep.subr.bf16.mxu0 0
    %1007 = vmatpush1.bf16.msra.mxu0 0
    %1008 = vmatprep.subr.bf16.mxu0 0
    %1009 = vmatpush1.bf16.msra.mxu0 0
    %1010 = vmatprep.subr.bf16.mxu0 0
    %1011 = vmatpush1.bf16.msra.mxu0 0
    %1012 = vmatprep.subr.bf16.mxu0 0
    %1013 = vmatpush1.bf16.msra.mxu0 0
    %1014 = vmatprep.subr.bf16.mxu0 0
    %1015 = vmatpush1.bf16.msra.mxu0 0
    %1016 = vmatprep.subr.bf16.mxu0 0
    %1017 = vmatpush1.bf16.msra.mxu0 0
    %1018 = vmatprep.subr.bf16.mxu0 0
    %1019 = vmatpush1.bf16.msra.mxu0 0
    %1020 = vmatprep.subr.bf16.mxu0 0
    %1021 = vmatpush1.bf16.msra.mxu0 0
    %1022 = vmatprep.subr.bf16.mxu0 0
    %1023 = vmatpush1.bf16.msra.mxu0 0
    %1024 = vmatprep.subr.bf16.mxu0 0
    %1025 = vmatpush1.bf16.msra.mxu0 0
    %1026 = vmatprep.mubr.bf16.mxu0 0
    %1027 = vmatmul.mubr.bf16.gmra.mrb[0].mxu0 %v992
    %v1028 = vpop.f32.mrb[0].mxu0
    %v1029 = vadd.f32 0.0, %v1028
    %v1030 = vpop.f32.mrb[0].mxu0
    %v1031 = vpop.f32.mrb[0].mxu0
    %v1032 = vpop.f32.mrb[0].mxu0
    %1033 = vdwg.mxu0
    %v1035 = vsel %vm130, %v878, 0
    %1037 = vmatprep.subr.bf16.mxu0 0
    %1038 = vmatpush1.bf16.msra.mxu0 %v404
    %1039 = vmatprep.subr.bf16.mxu0 0
    %1040 = vmatpush1.bf16.msra.mxu0 0
    %1041 = vmatprep.subr.bf16.mxu0 0
    %1042 = vmatpush1.bf16.msra.mxu0 0
    %1043 = vmatprep.subr.bf16.mxu0 0
    %1044 = vmatpush1.bf16.msra.mxu0 0
    %1045 = vmatprep.subr.bf16.mxu0 0
    %1046 = vmatpush1.bf16.msra.mxu0 0
    %1047 = vmatprep.subr.bf16.mxu0 0
    %1048 = vmatpush1.bf16.msra.mxu0 0
    %1049 = vmatprep.subr.bf16.mxu0 0
    %1050 = vmatpush1.bf16.msra.mxu0 0
    %1051 = vmatprep.subr.bf16.mxu0 0
    %1052 = vmatpush1.bf16.msra.mxu0 0
    %1053 = vmatprep.subr.bf16.mxu0 0
    %1054 = vmatpush1.bf16.msra.mxu0 0
    %1055 = vmatprep.subr.bf16.mxu0 0
    %1056 = vmatpush1.bf16.msra.mxu0 0
    %1057 = vmatprep.subr.bf16.mxu0 0
    %1058 = vmatpush1.bf16.msra.mxu0 0
    %1059 = vmatprep.subr.bf16.mxu0 0
    %1060 = vmatpush1.bf16.msra.mxu0 0
    %1061 = vmatprep.subr.bf16.mxu0 0
    %1062 = vmatpush1.bf16.msra.mxu0 0
    %1063 = vmatprep.subr.bf16.mxu0 0
    %1064 = vmatpush1.bf16.msra.mxu0 0
    %1065 = vmatprep.subr.bf16.mxu0 0
    %1066 = vmatpush1.bf16.msra.mxu0 0
    %1067 = vmatprep.subr.bf16.mxu0 0
    %1068 = vmatpush1.bf16.msra.mxu0 0
    %1069 = vmatprep.mubr.bf16.mxu0 0
    %1070 = vmatmul.mubr.bf16.gmra.mrb[0].mxu0 %v1035
    %v1071 = vpop.f32.mrb[0].mxu0
    %v1072 = vadd.f32 %v1029, %v1071
    %v1073 = vpop.f32.mrb[0].mxu0
    %v1074 = vpop.f32.mrb[0].mxu0
    %v1075 = vpop.f32.mrb[0].mxu0
    %1076 = vdwg.mxu0
    %1077 = vrot.lane.b32.xlu0 %v767, 112
    %v1078 = vpop.permute.xlu0 %1077
    %1079 = vrot.lane.b32.xlu0 %v768, 80
    %v1080 = vpop.permute.xlu0 %1079
    %v1082 = vsel %vm130, %v1078, 0
    %v1085 = vsel %vm130, %v1080, 0
    %1087 = vmatprep.subr.bf16.mxu0 0
    %1088 = vmatpush1.bf16.xpose.msra.mxu0 %v1085
    %1089 = vmatprep.subr.bf16.mxu0 0
    %1090 = vmatpush1.bf16.xpose.msra.mxu0 0
    %1091 = vmatprep.subr.bf16.mxu0 0
    %1092 = vmatpush1.bf16.xpose.msra.mxu0 0
    %1093 = vmatprep.subr.bf16.mxu0 0
    %1094 = vmatpush1.bf16.xpose.msra.mxu0 0
    %1095 = vmatprep.subr.bf16.mxu0 0
    %1096 = vmatpush1.bf16.xpose.msra.mxu0 0
    %1097 = vmatprep.subr.bf16.mxu0 0
    %1098 = vmatpush1.bf16.xpose.msra.mxu0 0
    %1099 = vmatprep.subr.bf16.mxu0 0
    %1100 = vmatpush1.bf16.xpose.msra.mxu0 0
    %1101 = vmatprep.subr.bf16.mxu0 0
    %1102 = vmatpush1.bf16.xpose.msra.mxu0 0
    %1103 = vmatprep.subr.bf16.mxu0 0
    %1104 = vmatpush1.bf16.xpose.msra.mxu0 0
    %1105 = vmatprep.subr.bf16.mxu0 0
    %1106 = vmatpush1.bf16.xpose.msra.mxu0 0
    %1107 = vmatprep.subr.bf16.mxu0 0
    %1108 = vmatpush1.bf16.xpose.msra.mxu0 0
    %1109 = vmatprep.subr.bf16.mxu0 0
    %1110 = vmatpush1.bf16.xpose.msra.mxu0 0
    %1111 = vmatprep.subr.bf16.mxu0 0
    %1112 = vmatpush1.bf16.xpose.msra.mxu0 0
    %1113 = vmatprep.subr.bf16.mxu0 0
    %1114 = vmatpush1.bf16.xpose.msra.mxu0 0
    %1115 = vmatprep.subr.bf16.mxu0 0
    %1116 = vmatpush1.bf16.xpose.msra.mxu0 0
    %1117 = vmatprep.subr.bf16.mxu0 0
    %1118 = vmatpush1.bf16.xpose.msra.mxu0 0
    %1119 = vmatprep.mubr.bf16.mxu0 0
    %1120 = vmatmul.mubr.bf16.gmra.mrb[0].mxu0 %v1082
    %v1121 = vpop.f32.mrb[0].mxu0
    %v1122 = vadd.f32 0.0, %v1121
    %v1123 = vpop.f32.mrb[0].mxu0
    %v1124 = vpop.f32.mrb[0].mxu0
    %v1125 = vpop.f32.mrb[0].mxu0
    %1126 = vdwg.mxu0
    %v1127 = vsel %vm130, %v1122, -inf
    %1128 = vmax.xlane.f32.xlu0 %v1127
    %v1129 = vpop.xlane.xlu0 %1128
    %v1130 = vsub.f32 %v1122, %v1129
    %v1131 = vmul.f32 %v1130, 1.442695
    %v1132 = vpow.pop %v1131
    %v1133 = vsel %vm130, %v1132, 0.0
    %1134 = vadd.xlane.f32.xlu0 %v1133
    %v1135 = vpop.xlane.xlu0 %1134
    %v1136 = vrcp.pop %v1135
    %v1137 = vmul.f32 %v1132, %v1136
    %v1138 = vpack.c.bf16 %v1137, %v1137
    %1139 = vrot.lane.b32.xlu0 %v768, 48
    %v1140 = vpop.permute.xlu0 %1139
    %v1142 = vsel %vm130, %v1138, 0
    %v1145 = vsel %vm194, %v1140, 0
    %1147 = vmatprep.subr.bf16.mxu0 0
    %1148 = vmatpush1.bf16.msra.mxu0 %v1145
    %1149 = vmatprep.subr.bf16.mxu0 0
    %1150 = vmatpush1.bf16.msra.mxu0 0
    %1151 = vmatprep.subr.bf16.mxu0 0
    %1152 = vmatpush1.bf16.msra.mxu0 0
    %1153 = vmatprep.subr.bf16.mxu0 0
    %1154 = vmatpush1.bf16.msra.mxu0 0
    %1155 = vmatprep.subr.bf16.mxu0 0
    %1156 = vmatpush1.bf16.msra.mxu0 0
    %1157 = vmatprep.subr.bf16.mxu0 0
    %1158 = vmatpush1.bf16.msra.mxu0 0
    %1159 = vmatprep.subr.bf16.mxu0 0
    %1160 = vmatpush1.bf16.msra.mxu0 0
    %1161 = vmatprep.subr.bf16.mxu0 0
    %1162 = vmatpush1.bf16.msra.mxu0 0
    %1163 = vmatprep.subr.bf16.mxu0 0
    %1164 = vmatpush1.bf16.msra.mxu0 0
    %1165 = vmatprep.subr.bf16.mxu0 0
    %1166 = vmatpush1.bf16.msra.mxu0 0
    %1167 = vmatprep.subr.bf16.mxu0 0
    %1168 = vmatpush1.bf16.msra.mxu0 0
    %1169 = vmatprep.subr.bf16.mxu0 0
    %1170 = vmatpush1.bf16.msra.mxu0 0
    %1171 = vmatprep.subr.bf16.mxu0 0
    %1172 = vmatpush1.bf16.msra.mxu0 0
    %1173 = vmatprep.subr.bf16.mxu0 0
    %1174 = vmatpush1.bf16.msra.mxu0 0
    %1175 = vmatprep.subr.bf16.mxu0 0
    %1176 = vmatpush1.bf16.msra.mxu0 0
    %1177 = vmatprep.subr.bf16.mxu0 0
    %1178 = vmatpush1.bf16.msra.mxu0 0
    %1179 = vmatprep.mubr.bf16.mxu0 0
    %1180 = vmatmul.mubr.bf16.gmra.mrb[0].mxu0 %v1142
    %v1181 = vpop.f32.mrb[0].mxu0
    %v1182 = vadd.f32 0.0, %v1181
    %v1183 = vpop.f32.mrb[0].mxu0
    %v1184 = vpop.f32.mrb[0].mxu0
    %v1185 = vpop.f32.mrb[0].mxu0
    %1186 = vdwg.mxu0
    %v1187 = vpack.c.bf16 %v1182, %v1182
    %v1189 = vsel %vm130, %v1187, 0
    %1191 = vmatprep.subr.bf16.mxu0 0
    %1192 = vmatpush1.bf16.msra.mxu0 %v563
    %1193 = vmatprep.subr.bf16.mxu0 0
    %1194 = vmatpush1.bf16.msra.mxu0 0
    %1195 = vmatprep.subr.bf16.mxu0 0
    %1196 = vmatpush1.bf16.msra.mxu0 0
    %1197 = vmatprep.subr.bf16.mxu0 0
    %1198 = vmatpush1.bf16.msra.mxu0 0
    %1199 = vmatprep.subr.bf16.mxu0 0
    %1200 = vmatpush1.bf16.msra.mxu0 0
    %1201 = vmatprep.subr.bf16.mxu0 0
    %1202 = vmatpush1.bf16.msra.mxu0 0
    %1203 = vmatprep.subr.bf16.mxu0 0
    %1204 = vmatpush1.bf16.msra.mxu0 0
    %1205 = vmatprep.subr.bf16.mxu0 0
    %1206 = vmatpush1.bf16.msra.mxu0 0
    %1207 = vmatprep.subr.bf16.mxu0 0
    %1208 = vmatpush1.bf16.msra.mxu0 0
    %1209 = vmatprep.subr.bf16.mxu0 0
    %1210 = vmatpush1.bf16.msra.mxu0 0
    %1211 = vmatprep.subr.bf16.mxu0 0
    %1212 = vmatpush1.bf16.msra.mxu0 0
    %1213 = vmatprep.subr.bf16.mxu0 0
    %1214 = vmatpush1.bf16.msra.mxu0 0
    %1215 = vmatprep.subr.bf16.mxu0 0
    %1216 = vmatpush1.bf16.msra.mxu0 0
    %1217 = vmatprep.subr.bf16.mxu0 0
    %1218 = vmatpush1.bf16.msra.mxu0 0
    %1219 = vmatprep.subr.bf16.mxu0 0
    %1220 = vmatpush1.bf16.msra.mxu0 0
    %1221 = vmatprep.subr.bf16.mxu0 0
    %1222 = vmatpush1.bf16.msra.mxu0 0
    %1223 = vmatprep.mubr.bf16.mxu0 0
    %1224 = vmatmul.mubr.bf16.gmra.mrb[0].mxu0 %v1189
    %v1225 = vpop.f32.mrb[0].mxu0
    %v1226 = vadd.f32 0.0, %v1225
    %v1227 = vpop.f32.mrb[0].mxu0
    %v1228 = vpop.f32.mrb[0].mxu0
    %v1229 = vpop.f32.mrb[0].mxu0
    %1230 = vdwg.mxu0
    %v1231 = vadd.f32 %v1072, %v1226
    %1232 = vrot.lane.b32.xlu0 %v767, 104
    %v1233 = vpop.permute.xlu0 %1232
    %1234 = vrot.lane.b32.xlu0 %v768, 72
    %v1235 = vpop.permute.xlu0 %1234
    %v1237 = vsel %vm130, %v1233, 0
    %v1240 = vsel %vm130, %v1235, 0
    %1242 = vmatprep.subr.bf16.mxu0 0
    %1243 = vmatpush1.bf16.xpose.msra.mxu0 %v1240
    %1244 = vmatprep.subr.bf16.mxu0 0
    %1245 = vmatpush1.bf16.xpose.msra.mxu0 0
    %1246 = vmatprep.subr.bf16.mxu0 0
    %1247 = vmatpush1.bf16.xpose.msra.mxu0 0
    %1248 = vmatprep.subr.bf16.mxu0 0
    %1249 = vmatpush1.bf16.xpose.msra.mxu0 0
    %1250 = vmatprep.subr.bf16.mxu0 0
    %1251 = vmatpush1.bf16.xpose.msra.mxu0 0
    %1252 = vmatprep.subr.bf16.mxu0 0
    %1253 = vmatpush1.bf16.xpose.msra.mxu0 0
    %1254 = vmatprep.subr.bf16.mxu0 0
    %1255 = vmatpush1.bf16.xpose.msra.mxu0 0
    %1256 = vmatprep.subr.bf16.mxu0 0
    %1257 = vmatpush1.bf16.xpose.msra.mxu0 0
    %1258 = vmatprep.subr.bf16.mxu0 0
    %1259 = vmatpush1.bf16.xpose.msra.mxu0 0
    %1260 = vmatprep.subr.bf16.mxu0 0
    %1261 = vmatpush1.bf16.xpose.msra.mxu0 0
    %1262 = vmatprep.subr.bf16.mxu0 0
    %1263 = vmatpush1.bf16.xpose.msra.mxu0 0
    %1264 = vmatprep.subr.bf16.mxu0 0
    %1265 = vmatpush1.bf16.xpose.msra.mxu0 0
    %1266 = vmatprep.subr.bf16.mxu0 0
    %1267 = vmatpush1.bf16.xpose.msra.mxu0 0
    %1268 = vmatprep.subr.bf16.mxu0 0
    %1269 = vmatpush1.bf16.xpose.msra.mxu0 0
    %1270 = vmatprep.subr.bf16.mxu0 0
    %1271 = vmatpush1.bf16.xpose.msra.mxu0 0
    %1272 = vmatprep.subr.bf16.mxu0 0
    %1273 = vmatpush1.bf16.xpose.msra.mxu0 0
    %1274 = vmatprep.mubr.bf16.mxu0 0
    %1275 = vmatmul.mubr.bf16.gmra.mrb[0].mxu0 %v1237
    %v1276 = vpop.f32.mrb[0].mxu0
    %v1277 = vadd.f32 0.0, %v1276
    %v1278 = vpop.f32.mrb[0].mxu0
    %v1279 = vpop.f32.mrb[0].mxu0
    %v1280 = vpop.f32.mrb[0].mxu0
    %1281 = vdwg.mxu0
    %v1282 = vsel %vm130, %v1277, -inf
    %1283 = vmax.xlane.f32.xlu0 %v1282
    %v1284 = vpop.xlane.xlu0 %1283
    %v1285 = vsub.f32 %v1277, %v1284
    %v1286 = vmul.f32 %v1285, 1.442695
    %v1287 = vpow.pop %v1286
    %v1288 = vsel %vm130, %v1287, 0.0
    %1289 = vadd.xlane.f32.xlu0 %v1288
    %v1290 = vpop.xlane.xlu0 %1289
    %v1291 = vrcp.pop %v1290
    %v1292 = vmul.f32 %v1287, %v1291
    %v1293 = vpack.c.bf16 %v1292, %v1292
    %1294 = vrot.lane.b32.xlu0 %v768, 40
    %v1295 = vpop.permute.xlu0 %1294
    %v1297 = vsel %vm130, %v1293, 0
    %v1300 = vsel %vm194, %v1295, 0
    %1302 = vmatprep.subr.bf16.mxu0 0
    %1303 = vmatpush1.bf16.msra.mxu0 %v1300
    %1304 = vmatprep.subr.bf16.mxu0 0
    %1305 = vmatpush1.bf16.msra.mxu0 0
    %1306 = vmatprep.subr.bf16.mxu0 0
    %1307 = vmatpush1.bf16.msra.mxu0 0
    %1308 = vmatprep.subr.bf16.mxu0 0
    %1309 = vmatpush1.bf16.msra.mxu0 0
    %1310 = vmatprep.subr.bf16.mxu0 0
    %1311 = vmatpush1.bf16.msra.mxu0 0
    %1312 = vmatprep.subr.bf16.mxu0 0
    %1313 = vmatpush1.bf16.msra.mxu0 0
    %1314 = vmatprep.subr.bf16.mxu0 0
    %1315 = vmatpush1.bf16.msra.mxu0 0
    %1316 = vmatprep.subr.bf16.mxu0 0
    %1317 = vmatpush1.bf16.msra.mxu0 0
    %1318 = vmatprep.subr.bf16.mxu0 0
    %1319 = vmatpush1.bf16.msra.mxu0 0
    %1320 = vmatprep.subr.bf16.mxu0 0
    %1321 = vmatpush1.bf16.msra.mxu0 0
    %1322 = vmatprep.subr.bf16.mxu0 0
    %1323 = vmatpush1.bf16.msra.mxu0 0
    %1324 = vmatprep.subr.bf16.mxu0 0
    %1325 = vmatpush1.bf16.msra.mxu0 0
    %1326 = vmatprep.subr.bf16.mxu0 0
    %1327 = vmatpush1.bf16.msra.mxu0 0
    %1328 = vmatprep.subr.bf16.mxu0 0
    %1329 = vmatpush1.bf16.msra.mxu0 0
    %1330 = vmatprep.subr.bf16.mxu0 0
    %1331 = vmatpush1.bf16.msra.mxu0 0
    %1332 = vmatprep.subr.bf16.mxu0 0
    %1333 = vmatpush1.bf16.msra.mxu0 0
    %1334 = vmatprep.mubr.bf16.mxu0 0
    %1335 = vmatmul.mubr.bf16.gmra.mrb[0].mxu0 %v1297
    %v1336 = vpop.f32.mrb[0].mxu0
    %v1337 = vadd.f32 0.0, %v1336
    %v1338 = vpop.f32.mrb[0].mxu0
    %v1339 = vpop.f32.mrb[0].mxu0
    %v1340 = vpop.f32.mrb[0].mxu0
    %1341 = vdwg.mxu0
    %v1342 = vpack.c.bf16 %v1337, %v1337
    %v1344 = vsel %vm130, %v1342, 0
    %1346 = vmatprep.subr.bf16.mxu0 0
    %1347 = vmatpush1.bf16.msra.mxu0 %v723
    %1348 = vmatprep.subr.bf16.mxu0 0
    %1349 = vmatpush1.bf16.msra.mxu0 0
    %1350 = vmatprep.subr.bf16.mxu0 0
    %1351 = vmatpush1.bf16.msra.mxu0 0
    %1352 = vmatprep.subr.bf16.mxu0 0
    %1353 = vmatpush1.bf16.msra.mxu0 0
    %1354 = vmatprep.subr.bf16.mxu0 0
    %1355 = vmatpush1.bf16.msra.mxu0 0
    %1356 = vmatprep.subr.bf16.mxu0 0
    %1357 = vmatpush1.bf16.msra.mxu0 0
    %1358 = vmatprep.subr.bf16.mxu0 0
    %1359 = vmatpush1.bf16.msra.mxu0 0
    %1360 = vmatprep.subr.bf16.mxu0 0
    %1361 = vmatpush1.bf16.msra.mxu0 0
    %1362 = vmatprep.subr.bf16.mxu0 0
    %1363 = vmatpush1.bf16.msra.mxu0 0
    %1364 = vmatprep.subr.bf16.mxu0 0
    %1365 = vmatpush1.bf16.msra.mxu0 0
    %1366 = vmatprep.subr.bf16.mxu0 0
    %1367 = vmatpush1.bf16.msra.mxu0 0
    %1368 = vmatprep.subr.bf16.mxu0 0
    %1369 = vmatpush1.bf16.msra.mxu0 0
    %1370 = vmatprep.subr.bf16.mxu0 0
    %1371 = vmatpush1.bf16.msra.mxu0 0
    %1372 = vmatprep.subr.bf16.mxu0 0
    %1373 = vmatpush1.bf16.msra.mxu0 0
    %1374 = vmatprep.subr.bf16.mxu0 0
    %1375 = vmatpush1.bf16.msra.mxu0 0
    %1376 = vmatprep.subr.bf16.mxu0 0
    %1377 = vmatpush1.bf16.msra.mxu0 0
    %1378 = vmatprep.mubr.bf16.mxu0 0
    %1379 = vmatmul.mubr.bf16.gmra.mrb[0].mxu0 %v1344
    %v1380 = vpop.f32.mrb[0].mxu0
    %v1381 = vadd.f32 0.0, %v1380
    %v1382 = vpop.f32.mrb[0].mxu0
    %v1383 = vpop.f32.mrb[0].mxu0
    %v1384 = vpop.f32.mrb[0].mxu0
    %1385 = vdwg.mxu0
    %v1386 = vadd.f32 %v1231, %v1381
    %v1387 = vadd.f32 %v765, %v56
    %v1388 = vadd.f32 %v1386, %v57
    %v1389 = vld [vmem:[%s3] sm:$0x1]
    %v1390 = vld [vmem:[%s4] sm:$0x1]
    %v1391 = vsel %vm79, %v1387, 0.0
    %1392 = vadd.xlane.f32.xlu0 %v1391
    %v1393 = vpop.xlane.xlu0 %1392
    %v1394 = vsel %vm79, %v1388, 0.0
    %1395 = vadd.xlane.f32.xlu0 %v1394
    %v1396 = vpop.xlane.xlu0 %1395
    %v1397 = vrcp.pop 32.0
    %v1398 = vmul.f32 %v1393, %v1397
    %v1399 = vmul.f32 %v1396, %v1397
    %v1400 = vsub.f32 %v1387, %v1398
    %v1401 = vsub.f32 %v1388, %v1399
    %v1402 = vmul.f32 %v1400, %v1400
    %v1403 = vmul.f32 %v1401, %v1401
    %v1404 = vsel %vm79, %v1402, 0.0
    %1405 = vadd.xlane.f32.xlu0 %v1404
    %v1406 = vpop.xlane.xlu0 %1405
    %v1407 = vsel %vm79, %v1403, 0.0
    %1408 = vadd.xlane.f32.xlu0 %v1407
    %v1409 = vpop.xlane.xlu0 %1408
    %v1410 = vmul.f32 %v1406, %v1397
    %v1411 = vmul.f32 %v1409, %v1397
    %v1412 = vadd.f32 %v1410, 1e-05
    %v1413 = vadd.f32 %v1411, 1e-05
    %v1414 = vrsqrt.pop %v1412
    %v1415 = vrsqrt.pop %v1413
    %v1416 = vmul.f32 %v1400, %v1414
    %v1417 = vmul.f32 %v1401, %v1415
    %v1419 = vlaneseq
    %v1420 = vshrl.u32 %v1419, 7
    %v1421 = vsub.s32 0, %v1420
    %v1422 = vrot.slane %v1389, %v1421
    %v1424 = vmul.f32 %v1416, %v1422
    %v1425 = vmul.f32 %v1417, %v1422
    %v1427 = vlaneseq
    %v1428 = vshrl.u32 %v1427, 7
    %v1429 = vsub.s32 0, %v1428
    %v1430 = vrot.slane %v1390, %v1429
    %v1432 = vadd.f32 %v1424, %v1430
    %v1433 = vadd.f32 %v1425, %v1430
    %v1434 = vpack.c.bf16 %v1433, %v1432
    %v1435 = vld [vmem:[%s5] sm:$0xf]
    %v1436 = vld [vmem:[%s5 + $0x4] sm:$0xf]
    %v1437 = vld [vmem:[%s5 + $0x8] sm:$0xf]
    %v1438 = vld [vmem:[%s5 + $0xc] sm:$0xf]
    %v1439 = vld [vmem:[%s6] sm:$0x1]
    %v1441 = vlaneseq
    %v1442 = vshrl.u32 %v1441, 7
    %v1443 = vsub.s32 0, %v1442
    %v1444 = vrot.slane %v1439, %v1443
    %v1450 = vunpack.c.l.b16 %v1435
    %v1451 = vunpack.c.l.b16 %v1436
    %v1452 = vunpack.c.l.b16 %v1437
    %v1453 = vunpack.c.l.b16 %v1438
    %v1454 = vpack.c.b16 %v1451, %v1450
    %v1455 = vpack.c.b16 %v1453, %v1452
    %v1459 = vsel %vm79, %v1434, 0
    %1461 = vmatprep.subr.bf16.mxu0 0
    %1462 = vmatpush1.bf16.msra.mxu0 %v1454
    %1463 = vmatprep.subr.bf16.mxu0 0
    %1464 = vmatpush1.bf16.msra.mxu0 %v1455
    %1465 = vmatprep.subr.bf16.mxu0 0
    %1466 = vmatpush1.bf16.msra.mxu0 0
    %1467 = vmatprep.subr.bf16.mxu0 0
    %1468 = vmatpush1.bf16.msra.mxu0 0
    %1469 = vmatprep.subr.bf16.mxu0 0
    %1470 = vmatpush1.bf16.msra.mxu0 0
    %1471 = vmatprep.subr.bf16.mxu0 0
    %1472 = vmatpush1.bf16.msra.mxu0 0
    %1473 = vmatprep.subr.bf16.mxu0 0
    %1474 = vmatpush1.bf16.msra.mxu0 0
    %1475 = vmatprep.subr.bf16.mxu0 0
    %1476 = vmatpush1.bf16.msra.mxu0 0
    %1477 = vmatprep.subr.bf16.mxu0 0
    %1478 = vmatpush1.bf16.msra.mxu0 0
    %1479 = vmatprep.subr.bf16.mxu0 0
    %1480 = vmatpush1.bf16.msra.mxu0 0
    %1481 = vmatprep.subr.bf16.mxu0 0
    %1482 = vmatpush1.bf16.msra.mxu0 0
    %1483 = vmatprep.subr.bf16.mxu0 0
    %1484 = vmatpush1.bf16.msra.mxu0 0
    %1485 = vmatprep.subr.bf16.mxu0 0
    %1486 = vmatpush1.bf16.msra.mxu0 0
    %1487 = vmatprep.subr.bf16.mxu0 0
    %1488 = vmatpush1.bf16.msra.mxu0 0
    %1489 = vmatprep.subr.bf16.mxu0 0
    %1490 = vmatpush1.bf16.msra.mxu0 0
    %1491 = vmatprep.subr.bf16.mxu0 0
    %1492 = vmatpush1.bf16.msra.mxu0 0
    %1493 = vmatprep.mubr.bf16.mxu0 0
    %1494 = vmatmul.mubr.bf16.gmra.mrb[0].mxu0 %v1459
    %v1495 = vpop.f32.mrb[0].mxu0
    %v1496 = vadd.f32 %v1444, %v1495
    %v1497 = vpop.f32.mrb[0].mxu0
    %v1498 = vpop.f32.mrb[0].mxu0
    %v1499 = vadd.f32 %v1444, %v1498
    %v1500 = vpop.f32.mrb[0].mxu0
    %1501 = vdwg.mxu0
    %v1502 = vmax.f32 %v1496, 0.0
    %v1503 = vmax.f32 %v1499, 0.0
    %v1504 = vpack.c.bf16 %v1503, %v1502
    %v1505 = vld [vmem:[%s7] sm:$0xf]
    %v1506 = vld [vmem:[%s7 + $0x4] sm:$0xf]
    %v1507 = vld [vmem:[%s7 + $0x8] sm:$0xf]
    %v1508 = vld [vmem:[%s7 + $0xc] sm:$0xf]
    %v1509 = vld [vmem:[%s7 + $0x10] sm:$0xf]
    %v1510 = vld [vmem:[%s7 + $0x14] sm:$0xf]
    %v1511 = vld [vmem:[%s7 + $0x18] sm:$0xf]
    %v1512 = vld [vmem:[%s7 + $0x1c] sm:$0xf]
    %v1513 = vld [vmem:[%s8] sm:$0x1]
    %v1515 = vlaneseq
    %v1516 = vshrl.u32 %v1515, 7
    %v1517 = vsub.s32 0, %v1516
    %v1518 = vrot.slane %v1513, %v1517
    %v1528 = vunpack.c.l.b16 %v1505
    %v1529 = vunpack.c.l.b16 %v1506
    %v1530 = vunpack.c.l.b16 %v1507
    %v1531 = vunpack.c.l.b16 %v1508
    %v1532 = vunpack.c.l.b16 %v1509
    %v1533 = vunpack.c.l.b16 %v1510
    %v1534 = vunpack.c.l.b16 %v1511
    %v1535 = vunpack.c.l.b16 %v1512
    %v1536 = vpack.c.b16 %v1529, %v1528
    %v1537 = vpack.c.b16 %v1531, %v1530
    %v1538 = vpack.c.b16 %v1533, %v1532
    %v1539 = vpack.c.b16 %v1535, %v1534
    %vm1544 = vcmask 523264
    %v1546 = vsel %vm1544, %v1504, 0
    %1548 = vmatprep.subr.bf16.mxu0 0
    %1549 = vmatpush1.bf16.msra.mxu0 %v1536
    %1550 = vmatprep.subr.bf16.mxu0 0
    %1551 = vmatpush1.bf16.msra.mxu0 %v1537
    %1552 = vmatprep.subr.bf16.mxu0 0
    %1553 = vmatpush1.bf16.msra.mxu0 %v1538
    %1554 = vmatprep.subr.bf16.mxu0 0
    %1555 = vmatpush1.bf16.msra.mxu0 %v1539
    %1556 = vmatprep.subr.bf16.mxu0 0
    %1557 = vmatpush1.bf16.msra.mxu0 0
    %1558 = vmatprep.subr.bf16.mxu0 0
    %1559 = vmatpush1.bf16.msra.mxu0 0
    %1560 = vmatprep.subr.bf16.mxu0 0
    %1561 = vmatpush1.bf16.msra.mxu0 0
    %1562 = vmatprep.subr.bf16.mxu0 0
    %1563 = vmatpush1.bf16.msra.mxu0 0
    %1564 = vmatprep.subr.bf16.mxu0 0
    %1565 = vmatpush1.bf16.msra.mxu0 0
    %1566 = vmatprep.subr.bf16.mxu0 0
    %1567 = vmatpush1.bf16.msra.mxu0 0
    %1568 = vmatprep.subr.bf16.mxu0 0
    %1569 = vmatpush1.bf16.msra.mxu0 0
    %1570 = vmatprep.subr.bf16.mxu0 0
    %1571 = vmatpush1.bf16.msra.mxu0 0
    %1572 = vmatprep.subr.bf16.mxu0 0
    %1573 = vmatpush1.bf16.msra.mxu0 0
    %1574 = vmatprep.subr.bf16.mxu0 0
    %1575 = vmatpush1.bf16.msra.mxu0 0
    %1576 = vmatprep.subr.bf16.mxu0 0
    %1577 = vmatpush1.bf16.msra.mxu0 0
    %1578 = vmatprep.subr.bf16.mxu0 0
    %1579 = vmatpush1.bf16.msra.mxu0 0
    %1580 = vmatprep.mubr.bf16.mxu0 0
    %1581 = vmatmul.mubr.bf16.gmra.mrb[0].mxu0 %v1546
    %v1582 = vpop.f32.mrb[0].mxu0
    %v1583 = vadd.f32 %v1518, %v1582
    %v1584 = vpop.f32.mrb[0].mxu0
    %v1585 = vpop.f32.mrb[0].mxu0
    %v1586 = vadd.f32 %v1518, %v1585
    %v1587 = vpop.f32.mrb[0].mxu0
    %1588 = vdwg.mxu0
    %v1589 = vadd.f32 %v1583, %v1432
    %v1590 = vadd.f32 %v1586, %v1433
    %v1591 = vld [vmem:[%s9] sm:$0x1]
    %v1592 = vld [vmem:[%s10] sm:$0x1]
    %v1593 = vsel %vm79, %v1589, 0.0
    %1594 = vadd.xlane.f32.xlu0 %v1593
    %v1595 = vpop.xlane.xlu0 %1594
    %v1596 = vsel %vm79, %v1590, 0.0
    %1597 = vadd.xlane.f32.xlu0 %v1596
    %v1598 = vpop.xlane.xlu0 %1597
    %v1599 = vmul.f32 %v1595, %v1397
    %v1600 = vmul.f32 %v1598, %v1397
    %v1601 = vsub.f32 %v1589, %v1599
    %v1602 = vsub.f32 %v1590, %v1600
    %v1603 = vmul.f32 %v1601, %v1601
    %v1604 = vmul.f32 %v1602, %v1602
    %v1605 = vsel %vm79, %v1603, 0.0
    %1606 = vadd.xlane.f32.xlu0 %v1605
    %v1607 = vpop.xlane.xlu0 %1606
    %v1608 = vsel %vm79, %v1604, 0.0
    %1609 = vadd.xlane.f32.xlu0 %v1608
    %v1610 = vpop.xlane.xlu0 %1609
    %v1611 = vmul.f32 %v1607, %v1397
    %v1612 = vmul.f32 %v1610, %v1397
    %v1613 = vadd.f32 %v1611, 1e-05
    %v1614 = vadd.f32 %v1612, 1e-05
    %v1615 = vrsqrt.pop %v1613
    %v1616 = vrsqrt.pop %v1614
    %v1617 = vmul.f32 %v1601, %v1615
    %v1618 = vmul.f32 %v1602, %v1616
    %v1620 = vlaneseq
    %v1621 = vshrl.u32 %v1620, 7
    %v1622 = vsub.s32 0, %v1621
    %v1623 = vrot.slane %v1591, %v1622
    %v1625 = vmul.f32 %v1617, %v1623
    %v1626 = vmul.f32 %v1618, %v1623
    %v1628 = vlaneseq
    %v1629 = vshrl.u32 %v1628, 7
    %v1630 = vsub.s32 0, %v1629
    %v1631 = vrot.slane %v1592, %v1630
    %v1633 = vadd.f32 %v1625, %v1631
    %v1634 = vadd.f32 %v1626, %v1631
    %1635 = vst.msk [vmem:[#allocation5] sm:$0xff] %vm79, %v1633
    %1636 = vst.msk [vmem:[#allocation5 + $0x8] sm:$0xff] %vm79, %v1634
    // Predicated region
    $region50: #{tpu_custom_call.1} parent=1 // pred_check
      _
    $region51: #{tpu_custom_call.1} parent=1 // pred_check_branch
      %1638 = sbr.rel (0) target = $region53
    $region52: #{tpu_custom_call.1} parent=1 // pred_region
      %s1640 = ssub.s32 256, 256
      %1641 = vsyncadd [#allocation4], %s1640
      %s1642 = sshll.u32 [#allocation5], 4
      %s1643 = int_to_ptr.vmem [resolvable:$true] %s1642
      %1648 = dma.vmem_to_hbm [thread:$0]  %s1643, 256, %s11, [#allocation4], 128, 128, 8
    $region53: #{tpu_custom_call.1} parent=1 // pred_fallthru
      _
    // Predicated region
    $region54: #{tpu_custom_call.1} parent=1 // pred_check
      _
    $region55: #{tpu_custom_call.1} parent=1 // pred_check_branch
      %1650 = sbr.rel (0) target = $region57
    $region56: #{tpu_custom_call.1} parent=1 // pred_region
      %1651 = dma.done [#allocation4], 256
    $region57: #{tpu_custom_call.1} parent=1 // pred_fallthru
      _
    %1652 = vsyncpa [#allocation3], 1
    %1653 = vsyncpa [#allocation4], 1

</llo_original>
